<compile_context>
chip_gen: v6e
topology: v6e:2x2x1
jax: 0.10.0
libtpu: 0.0.40
codegen_flags: <defaults>
</compile_context>

<pallas_src>
import jax
import jax.numpy as jnp
from jax.experimental import pallas as pl
from jax.experimental.pallas import tpu as pltpu


def _round_up(x, n):
    return ((x + n - 1) // n) * n


def _sublane_floor(dtype):
    # Minimum row-tile granule per dtype packing: f32 -> 8, bf16 -> 16, 8-bit -> 32.
    return max(8, 32 // max(1, jnp.dtype(dtype).itemsize))


def _vmem_capacity_bytes():
    try:
        return int(pltpu.get_tpu_info().vmem_capacity_bytes)
    except Exception:
        return 64 << 20  # conservative: v7x per-TC VMEM


def _probe_buffered():
    try:
        pl.BlockSpec((8, 128), lambda i: (0, 0), pipeline_mode=pl.Buffered(1))
        return True
    except Exception:
        return False


_HAS_BUFFERED = _probe_buffered()
# If pipeline_mode is unavailable, "resident" operands fall back to default
# double-buffering; account 2x their bytes in the VMEM budget.
_RESIDENT_BUF_FACTOR = 1 if _HAS_BUFFERED else 2


def _resident_spec(shape):
    """BlockSpec for an operand constant across the whole grid."""
    idx = lambda *_: (0,) * len(shape)
    if _HAS_BUFFERED:
        return pl.BlockSpec(shape, idx, pipeline_mode=pl.Buffered(1))
    return pl.BlockSpec(shape, idx)


# ----------------------------- kernels ------------------------------------


def _phi_mlp_resident_kernel(x_ref, w1_ref, b1_ref, w2_ref, b2_ref, o_ref):
    # x:(tm,d_in)  w1:(d_in,d_mid)  b1:(1,d_mid)f32  w2:(d_mid,d_out)  b2:(1,d_out)f32
    h = jnp.dot(x_ref[...], w1_ref[...], preferred_element_type=jnp.float32)
    h = jax.nn.gelu(h + b1_ref[...], approximate=True)          # gelu_new, f32
    y = jnp.dot(h.astype(w2_ref.dtype), w2_ref[...],
                preferred_element_type=jnp.float32)
    o_ref[...] = (y + b2_ref[...]).astype(o_ref.dtype)


def _phi_mlp_streamed_kernel(x_ref, w1_ref, b1_ref, w2_ref, b2_ref, o_ref, acc_ref):
    # grid = (row tiles [parallel], d_mid slabs [arbitrary, innermost])
    # x:(tm,d_in)  w1 slab:(d_in,tk)  b1 slab:(1,tk)  w2 slab:(tk,d_out)
    k = pl.program_id(1)

    @pl.when(k == 0)
    def _():
        acc_ref[...] = jnp.zeros_like(acc_ref)

    h = jnp.dot(x_ref[...], w1_ref[...], preferred_element_type=jnp.float32)
    h = jax.nn.gelu(h + b1_ref[...], approximate=True)          # f32, (tm, tk) only
    acc_ref[...] += jnp.dot(h.astype(w2_ref.dtype), w2_ref[...],
                            preferred_element_type=jnp.float32)

    @pl.when(k == pl.num_programs(1) - 1)
    def _():
        o_ref[...] = (acc_ref[...] + b2_ref[...]).astype(o_ref.dtype)


# ----------------------------- wrapper -------------------------------------


def phi_mlp(hidden_states, w1_t, b1, w2_t, b2, *, tm=None, tk=None,
            force_streamed=False, vmem_limit_bytes=None):
    """Fused PhiMLP forward.

    hidden_states: [..., hidden_size]            (bf16 recommended for the MXU)
    w1_t: [hidden_size, intermediate_size]       (fc1 weight pre-transposed to [in, out])
    b1:   [intermediate_size]
    w2_t: [intermediate_size, hidden_size]       (fc2 weight pre-transposed to [in, out])
    b2:   [hidden_size]
    """
    d_in = hidden_states.shape[-1]
    d_mid = w1_t.shape[1]
    d_out = w2_t.shape[1]
    assert w1_t.shape == (d_in, d_mid), w1_t.shape
    assert w2_t.shape == (d_mid, d_out), w2_t.shape
    assert b1.shape == (d_mid,), b1.shape
    assert b2.shape == (d_out,), b2.shape

    lead = hidden_states.shape[:-1]
    x2d = hidden_states.reshape(-1, d_in)
    m = x2d.shape[0]
    x_itemsize = jnp.dtype(x2d.dtype).itemsize
    w_itemsize = jnp.dtype(w1_t.dtype).itemsize
    row_floor = _sublane_floor(x2d.dtype)

    cap = _vmem_capacity_bytes()
    budget = int(0.80 * cap)          # path-selection budget (per TensorCore)

    b1_r = jnp.asarray(b1, jnp.float32).reshape(1, d_mid)
    b2_r = jnp.asarray(b2, jnp.float32).reshape(1, d_out)

    cost = pl.CostEstimate(
        flops=2 * m * d_in * d_mid + 2 * m * d_mid * d_out,
        transcendentals=m * d_mid,
        bytes_accessed=(m * (d_in + d_out) * x_itemsize
                        + (d_in * d_mid + d_mid * d_out) * w_itemsize
                        + (d_mid + d_out) * 4),
    )

    # ---------- resident-weights path feasibility ----------
    def resident_working_set(tm_e):
        weights = _RESIDENT_BUF_FACTOR * (
            (d_in * d_mid + d_mid * d_out) * w_itemsize + (d_mid + d_out) * 4)
        tiles = 2 * tm_e * (d_in + d_out) * x_itemsize        # double-buffered x / out
        interm = tm_e * d_mid * (4 + w_itemsize)              # f32 h + cast copy
        return weights + tiles + interm

    tm_res = 256 if tm is None else tm
    tm_res_eff = max(row_floor, min(tm_res, _round_up(m, row_floor)))
    use_resident = (not force_streamed) and (resident_working_set(tm_res_eff) <= budget)

    if use_resident:
        tm_eff = tm_res_eff
        m_pad = _round_up(m, tm_eff)
        if m_pad != m:
            x2d = jnp.pad(x2d, ((0, m_pad - m), (0, 0)))

        vmem_limit = vmem_limit_bytes
        if vmem_limit is None:
            vmem_limit = min(int(0.90 * cap),
                             max(32 << 20,
                                 resident_working_set(tm_eff) + (8 << 20)))

        out2d = pl.pallas_call(
            _phi_mlp_resident_kernel,
            out_shape=jax.ShapeDtypeStruct((m_pad, d_out), hidden_states.dtype),
            grid_spec=pltpu.PrefetchScalarGridSpec(
                num_scalar_prefetch=0,
                grid=(m_pad // tm_eff,),
                in_specs=[
                    pl.BlockSpec((tm_eff, d_in), lambda i: (i, 0)),   # x row tile
                    _resident_spec((d_in, d_mid)),                    # W1^T
                    _resident_spec((1, d_mid)),                       # b1
                    _resident_spec((d_mid, d_out)),                   # W2^T
                    _resident_spec((1, d_out)),                       # b2
                ],
                out_specs=pl.BlockSpec((tm_eff, d_out), lambda i: (i, 0)),
            ),
            compiler_params=pltpu.CompilerParams(
                dimension_semantics=("parallel",),
                vmem_limit_bytes=int(vmem_limit),
            ),
            cost_estimate=cost,
        )(x2d, w1_t, b1_r, w2_t, b2_r)

    else:
        # ---------- streamed-weights path ----------
        tm_target = 512 if tm is None else tm                 # amortize slab DMA
        tk_target = 1024 if tk is None else tk
        tk_eff = min(_round_up(tk_target, 128), _round_up(d_mid, 128))
        tm_eff = max(row_floor, min(tm_target, _round_up(m, row_floor)))

        def streamed_working_set(tm_e, tk_e):
            return (2 * tm_e * d_in * x_itemsize              # x tile (dbl-buffered)
                    + 2 * d_in * tk_e * w_itemsize            # W1 column slab
                    + 2 * tk_e * 4                            # b1 slab
                    + 2 * tk_e * d_out * w_itemsize           # W2 row slab
                    + 2 * d_out * 4                           # b2
                    + 2 * tm_e * d_out * x_itemsize           # out tile
                    + tm_e * d_out * 4                        # f32 accumulator scratch
                    + tm_e * tk_e * (4 + w_itemsize))         # f32 h + cast copy

        while streamed_working_set(tm_eff, tk_eff) > budget and tk_eff > 512:
            tk_eff = max(512, _round_up(tk_eff // 2, 128))
        while streamed_working_set(tm_eff, tk_eff) > budget and tm_eff > 256:
            tm_eff = max(256, tm_eff // 2)
        while streamed_working_set(tm_eff, tk_eff) > budget and tk_eff > 128:
            tk_eff = max(128, _round_up(tk_eff // 2, 128))

        m_pad = _round_up(m, tm_eff)
        mid_pad = _round_up(d_mid, tk_eff)
        if m_pad != m:
            x2d = jnp.pad(x2d, ((0, m_pad - m), (0, 0)))
        if mid_pad != d_mid:
            # zero-padded d_mid is exact: gelu(0+0)=0 and the extra W2 rows are 0
            w1_t = jnp.pad(w1_t, ((0, 0), (0, mid_pad - d_mid)))
            b1_r = jnp.pad(b1_r, ((0, 0), (0, mid_pad - d_mid)))
            w2_t = jnp.pad(w2_t, ((0, mid_pad - d_mid), (0, 0)))

        vmem_limit = vmem_limit_bytes
        if vmem_limit is None:
            vmem_limit = min(int(0.90 * cap),
                             max(32 << 20,
                                 streamed_working_set(tm_eff, tk_eff) + (8 << 20)))

        out2d = pl.pallas_call(
            _phi_mlp_streamed_kernel,
            out_shape=jax.ShapeDtypeStruct((m_pad, d_out), hidden_states.dtype),
            grid_spec=pltpu.PrefetchScalarGridSpec(
                num_scalar_prefetch=0,
                grid=(m_pad // tm_eff, mid_pad // tk_eff),     # rows first, k innermost
                in_specs=[
                    pl.BlockSpec((tm_eff, d_in), lambda i, k: (i, 0)),   # x row tile
                    pl.BlockSpec((d_in, tk_eff), lambda i, k: (0, k)),   # W1 col slab
                    pl.BlockSpec((1, tk_eff), lambda i, k: (0, k)),      # b1 slab
                    pl.BlockSpec((tk_eff, d_out), lambda i, k: (k, 0)),  # W2 row slab
                    _resident_spec((1, d_out)),                          # b2
                ],
                out_specs=pl.BlockSpec((tm_eff, d_out), lambda i, k: (i, 0)),
                scratch_shapes=[pltpu.VMEM((tm_eff, d_out), jnp.float32)],
            ),
            compiler_params=pltpu.CompilerParams(
                dimension_semantics=("parallel", "arbitrary"),
                vmem_limit_bytes=int(vmem_limit),
            ),
            cost_estimate=cost,
        )(x2d, w1_t, b1_r, w2_t, b2_r)

    if out2d.shape[0] != m:
        out2d = out2d[:m]
    return out2d.reshape(*lead, d_out)


# ----------------------------- self-test ------------------------------------


def _reference(hidden_states, w1_t, b1, w2_t, b2):
    x = hidden_states.astype(jnp.float32)
    h = x @ w1_t.astype(jnp.float32) + b1.astype(jnp.float32)
    h = jax.nn.gelu(h, approximate=True)
    y = h @ w2_t.astype(jnp.float32) + b2.astype(jnp.float32)
    return y


if __name__ == "__main__":
    # Small, lane-aligned config: hidden_size=256, intermediate_size=1024,
    # batch=2, seq=8.  bf16 activations/weights (the production MXU contract),
    # f32 biases and f32 MXU accumulation inside the kernel.
    B, S = 2, 8
    D_HID, D_INT = 256, 1024

    key = jax.random.PRNGKey(0)
    k_x, k_w1, k_b1, k_w2, k_b2 = jax.random.split(key, 5)

    hidden_states = jax.random.normal(k_x, (B, S, D_HID), dtype=jnp.float32)
    # PyTorch nn.Linear(in, out): weight [out, in], bias [out].
    w1 = jax.random.normal(k_w1, (D_INT, D_HID), dtype=jnp.float32) * 0.02
    b1 = jax.random.normal(k_b1, (D_INT,), dtype=jnp.float32) * 0.02
    w2 = jax.random.normal(k_w2, (D_HID, D_INT), dtype=jnp.float32) * 0.02
    b2 = jax.random.normal(k_b2, (D_HID,), dtype=jnp.float32) * 0.02

    # bf16 MXU operands; weights pre-transposed ONCE outside the call path.
    x_bf16 = hidden_states.astype(jnp.bfloat16)
    w1_t = jnp.asarray(w1.T, jnp.bfloat16)   # [hidden, intermediate]
    w2_t = jnp.asarray(w2.T, jnp.bfloat16)   # [intermediate, hidden]

    ref = _reference(x_bf16, w1_t, b1, w2_t, b2)            # f32 reference

    # Path 1: resident weights (fits easily at these dims).
    out_res = jax.block_until_ready(phi_mlp(x_bf16, w1_t, b1, w2_t, b2))
    assert out_res.shape == (B, S, D_HID), out_res.shape
    err_res = float(jnp.max(jnp.abs(out_res.astype(jnp.float32) - ref)))
    assert jnp.allclose(out_res.astype(jnp.float32), ref, atol=3e-2, rtol=3e-2), (
        f"resident path mismatch, max abs err = {err_res}")

    # Path 2: streamed weights (the production path for real Phi dims / v7x);
    # force it here with a small d_mid slab so the k-accumulation is exercised.
    out_str = jax.block_until_ready(
        phi_mlp(x_bf16, w1_t, b1, w2_t, b2, force_streamed=True, tk=256))
    assert out_str.shape == (B, S, D_HID), out_str.shape
    err_str = float(jnp.max(jnp.abs(out_str.astype(jnp.float32) - ref)))
    assert jnp.allclose(out_str.astype(jnp.float32), ref, atol=3e-2, rtol=3e-2), (
        f"streamed path mismatch, max abs err = {err_str}")

    print("KERNEL_OK")
</pallas_src>

<mosaic_0001>
module attributes {stable_mosaic.version = 11 : i64} {
  func.func @_phi_mlp_resident_kernel(%arg0: i32, %arg1: memref<16x256xbf16, #tpu.memory_space<vmem>>, %arg2: memref<256x1024xbf16, #tpu.memory_space<vmem>>, %arg3: memref<1x1024xf32, #tpu.memory_space<vmem>>, %arg4: memref<1024x256xbf16, #tpu.memory_space<vmem>>, %arg5: memref<1x256xf32, #tpu.memory_space<vmem>>, %arg6: memref<16x256xbf16, #tpu.memory_space<vmem>>) attributes {dimension_semantics = [#tpu.dimension_semantics<parallel>], iteration_bounds = array<i64: 1>, scalar_prefetch = 0 : i64, scratch_operands = 0 : i64, tpu.core_type = #tpu.core_type<tc>, window_params = [{transform_indices = @transform_0, window_bounds = array<i64: 16, 256>}, {pipeline_mode = #tpu.pipeline_mode<synchronous>, transform_indices = @transform_1, window_bounds = array<i64: 256, 1024>}, {pipeline_mode = #tpu.pipeline_mode<synchronous>, transform_indices = @transform_2, window_bounds = array<i64: 1, 1024>}, {pipeline_mode = #tpu.pipeline_mode<synchronous>, transform_indices = @transform_3, window_bounds = array<i64: 1024, 256>}, {pipeline_mode = #tpu.pipeline_mode<synchronous>, transform_indices = @transform_4, window_bounds = array<i64: 1, 256>}, {transform_indices = @transform_5, window_bounds = array<i64: 16, 256>}]} {
    %c0 = arith.constant 0 : index
    %c0_0 = arith.constant 0 : index
    %0 = vector.load %arg1[%c0, %c0_0] : memref<16x256xbf16, #tpu.memory_space<vmem>>, vector<16x256xbf16>
    %c0_1 = arith.constant 0 : index
    %c0_2 = arith.constant 0 : index
    %1 = vector.load %arg2[%c0_1, %c0_2] : memref<256x1024xbf16, #tpu.memory_space<vmem>>, vector<256x1024xbf16>
    %cst = arith.constant dense<0.000000e+00> : vector<16x1024xf32>
    %2 = tpu.matmul %0, %1, %cst {dimension_numbers = #tpu.dot_dimension_numbers<[1], [0], [0], [1], [0, 0, 1, 1], [], []>} : vector<16x256xbf16>, vector<256x1024xbf16>, vector<16x1024xf32> -> vector<16x1024xf32>
    %c0_3 = arith.constant 0 : index
    %c0_4 = arith.constant 0 : index
    %3 = vector.load %arg3[%c0_3, %c0_4] : memref<1x1024xf32, #tpu.memory_space<vmem>>, vector<1x1024xf32>
    %4 = vector.broadcast %3 : vector<1x1024xf32> to vector<16x1024xf32>
    %5 = arith.addf %2, %4 : vector<16x1024xf32>
    %6 = arith.mulf %5, %5 : vector<16x1024xf32>
    %7 = arith.mulf %5, %6 : vector<16x1024xf32>
    %cst_5 = arith.constant 4.471500e-02 : f32
    %8 = vector.broadcast %cst_5 : f32 to vector<16x1024xf32>
    %9 = arith.mulf %8, %7 : vector<16x1024xf32>
    %10 = arith.addf %5, %9 : vector<16x1024xf32>
    %cst_6 = arith.constant 0.797884583 : f32
    %11 = vector.broadcast %cst_6 : f32 to vector<16x1024xf32>
    %12 = arith.mulf %11, %10 : vector<16x1024xf32>
    %13 = math.tanh %12 : vector<16x1024xf32>
    %cst_7 = arith.constant 1.000000e+00 : f32
    %14 = vector.broadcast %cst_7 : f32 to vector<16x1024xf32>
    %15 = arith.addf %14, %13 : vector<16x1024xf32>
    %cst_8 = arith.constant 5.000000e-01 : f32
    %16 = vector.broadcast %cst_8 : f32 to vector<16x1024xf32>
    %17 = arith.mulf %16, %15 : vector<16x1024xf32>
    %18 = arith.mulf %5, %17 : vector<16x1024xf32>
    %19 = arith.truncf %18 : vector<16x1024xf32> to vector<16x1024xbf16>
    %c0_9 = arith.constant 0 : index
    %c0_10 = arith.constant 0 : index
    %20 = vector.load %arg4[%c0_9, %c0_10] : memref<1024x256xbf16, #tpu.memory_space<vmem>>, vector<1024x256xbf16>
    %cst_11 = arith.constant dense<0.000000e+00> : vector<16x256xf32>
    %21 = tpu.matmul %19, %20, %cst_11 {dimension_numbers = #tpu.dot_dimension_numbers<[1], [0], [0], [1], [0, 0, 1, 1], [], []>} : vector<16x1024xbf16>, vector<1024x256xbf16>, vector<16x256xf32> -> vector<16x256xf32>
    %c0_12 = arith.constant 0 : index
    %c0_13 = arith.constant 0 : index
    %22 = vector.load %arg5[%c0_12, %c0_13] : memref<1x256xf32, #tpu.memory_space<vmem>>, vector<1x256xf32>
    %23 = vector.broadcast %22 : vector<1x256xf32> to vector<16x256xf32>
    %24 = arith.addf %21, %23 : vector<16x256xf32>
    %25 = arith.truncf %24 : vector<16x256xf32> to vector<16x256xbf16>
    %c0_14 = arith.constant 0 : index
    %c0_15 = arith.constant 0 : index
    %26 = vector.load %arg6[%c0_14, %c0_15] : memref<16x256xbf16, #tpu.memory_space<vmem>>, vector<16x256xbf16>
    tpu.vector_store %arg6[%c0_14, %c0_15], %25 {strides = array<i32>} : memref<16x256xbf16, #tpu.memory_space<vmem>>, vector<16x256xbf16>,
    return
  }
  func.func @transform_0(%arg0: i32) -> (i32, i32) {
    %c0_i32 = arith.constant 0 : i32
    %c0_i32_0 = arith.constant 0 : i32
    return %arg0, %c0_i32 : i32, i32
  }
  func.func @transform_1(%arg0: i32) -> (i32, i32) {
    %c0_i32 = arith.constant 0 : i32
    %c0_i32_0 = arith.constant 0 : i32
    %c0_i32_1 = arith.constant 0 : i32
    return %c0_i32, %c0_i32_0 : i32, i32
  }
  func.func @transform_2(%arg0: i32) -> (i32, i32) {
    %c0_i32 = arith.constant 0 : i32
    %c0_i32_0 = arith.constant 0 : i32
    %c0_i32_1 = arith.constant 0 : i32
    return %c0_i32, %c0_i32_0 : i32, i32
  }
  func.func @transform_3(%arg0: i32) -> (i32, i32) {
    %c0_i32 = arith.constant 0 : i32
    %c0_i32_0 = arith.constant 0 : i32
    %c0_i32_1 = arith.constant 0 : i32
    return %c0_i32, %c0_i32_0 : i32, i32
  }
  func.func @transform_4(%arg0: i32) -> (i32, i32) {
    %c0_i32 = arith.constant 0 : i32
    %c0_i32_0 = arith.constant 0 : i32
    %c0_i32_1 = arith.constant 0 : i32
    return %c0_i32, %c0_i32_0 : i32, i32
  }
  func.func @transform_5(%arg0: i32) -> (i32, i32) {
    %c0_i32 = arith.constant 0 : i32
    %c0_i32_0 = arith.constant 0 : i32
    return %arg0, %c0_i32 : i32, i32
  }
}

</mosaic_0001>

<llo_original>
// kernel: tpu_custom_call.1
$region0: #{tpu_custom_call.1}
  #allocation0 [shape = 'u32[]', space=smem, size = 0x4, offset = 0x4, fixed_abs, tag = 'smem constant byte address 0x4 - core index']
  #allocation1 [shape = 'u32[144,128]{1,0:T(1,128)}', space=vmem, size = 0x12000, scoped, tag = 'internal scratch']
  %s0 = inlined_call_operand.hbm [shape: bf16[16,256], index: 0, kind: input, shape index: {}]
  %s1 = inlined_call_operand.hbm [shape: bf16[256,1024], index: 1, kind: input, shape index: {}]
  %s2 = inlined_call_operand.hbm [shape: f32[1,1024], index: 2, kind: input, shape index: {}]
  %s3 = inlined_call_operand.hbm [shape: bf16[1024,256], index: 3, kind: input, shape index: {}]
  %s4 = inlined_call_operand.vmem [shape: f32[1,256], index: 4, kind: input, shape index: {}]
  %s5 = inlined_call_operand.hbm [shape: bf16[16,256], index: 5, kind: output, shape index: {}]
  %s6 = sld [smem:[#allocation0]]
  $region46: #{tpu_custom_call.1} parent=0
    _
  %s8 = ssub.s32 1, %s6
  %s9 = scalar_select 0, %s8, %s6
  $region1: #{tpu_custom_call.1} parent=0
    #allocation2 [shape = 'u8[8192]{0}', space=vmem, size = 0x2000, scoped, tag = 'input window, operand 0, single buffered']
    #allocation3 [shape = 's32[1]{0}', space=sflag, size = 0x4, scoped, tag = 'scoped memory for tpu_custom_call.1']
    #allocation4 [shape = 's32[1]{0}', space=sflag, size = 0x4, scoped, tag = 'scoped memory for tpu_custom_call.1']
    #allocation5 [shape = 'u8[524288]{0}', space=vmem, size = 0x80000, scoped, tag = 'input window, operand 1, single buffered']
    #allocation6 [shape = 's32[1]{0}', space=sflag, size = 0x4, scoped, tag = 'scoped memory for tpu_custom_call.1']
    #allocation7 [shape = 'u8[4096]{0}', space=vmem, size = 0x1000, scoped, tag = 'input window, operand 2, single buffered']
    #allocation8 [shape = 'u8[524288]{0}', space=vmem, size = 0x80000, scoped, tag = 'input window, operand 3, single buffered']
    #allocation9 [shape = 's32[1]{0}', space=sflag, size = 0x4, scoped, tag = 'scoped memory for tpu_custom_call.1']
    #allocation10 [shape = 'u8[8192]{0}', space=vmem, size = 0x2000, scoped, tag = 'output window, operand 0, single buffered']
    %10 = vsyncpa [#allocation3], 0
    %11 = vsyncpa [#allocation6], 0
    %12 = vsyncpa [#allocation9], 0
    %13 = vsyncpa [#allocation4], 0
    // Predicated region
    $region2: #{tpu_custom_call.1} parent=1 // pred_check
      _
    $region3: #{tpu_custom_call.1} parent=1 // pred_check_branch
      %15 = sbr.rel (0) target = $region5
    $region4: #{tpu_custom_call.1} parent=1 // pred_region
      %s17 = ssub.s32 256, 256
      %18 = vsyncadd [#allocation3], %s17
      %s19 = sshll.u32 [#allocation2], 4
      %s20 = int_to_ptr.vmem [resolvable:$true] %s19
      %25 = dma.hbm_to_vmem [thread:$0]  %s0, 256, %s20, [#allocation3], 128, 128, 8
    $region5: #{tpu_custom_call.1} parent=1 // pred_fallthru
      _
    // Predicated region
    $region6: #{tpu_custom_call.1} parent=1 // pred_check
      _
    $region7: #{tpu_custom_call.1} parent=1 // pred_check_branch
      %27 = sbr.rel (0) target = $region9
    $region8: #{tpu_custom_call.1} parent=1 // pred_region
      %s29 = ssub.s32 16384, 16384
      %30 = vsyncadd [#allocation6], %s29
      %s31 = sshll.u32 [#allocation5], 4
      %s32 = int_to_ptr.vmem [resolvable:$true] %s31
      %37 = dma.hbm_to_vmem [thread:$0]  %s1, 16384, %s32, [#allocation6], 512, 512, 32
    $region9: #{tpu_custom_call.1} parent=1 // pred_fallthru
      _
    // Predicated region
    $region10: #{tpu_custom_call.1} parent=1 // pred_check
      _
    $region11: #{tpu_custom_call.1} parent=1 // pred_check_branch
      %39 = sbr.rel (0) target = $region13
    $region12: #{tpu_custom_call.1} parent=1 // pred_region
      %s41 = ssub.s32 128, 128
      %42 = vsyncadd [#allocation6], %s41
      %s44 = sshll.u32 [#allocation7], 4
      %s45 = int_to_ptr.vmem [resolvable:$true] %s44
      %47 = dma.hbm_to_vmem [thread:$0]  %s2, 128, %s45, [#allocation6]
    $region13: #{tpu_custom_call.1} parent=1 // pred_fallthru
      _
    // Predicated region
    $region14: #{tpu_custom_call.1} parent=1 // pred_check
      _
    $region15: #{tpu_custom_call.1} parent=1 // pred_check_branch
      %49 = sbr.rel (0) target = $region17
    $region16: #{tpu_custom_call.1} parent=1 // pred_region
      %s51 = ssub.s32 16384, 16384
      %52 = vsyncadd [#allocation9], %s51
      %s53 = sshll.u32 [#allocation8], 4
      %s54 = int_to_ptr.vmem [resolvable:$true] %s53
      %59 = dma.hbm_to_vmem [thread:$0]  %s3, 16384, %s54, [#allocation9], 128, 128, 8
    $region17: #{tpu_custom_call.1} parent=1 // pred_fallthru
      _
    // Predicated region
    $region18: #{tpu_custom_call.1} parent=1 // pred_check
      _
    $region19: #{tpu_custom_call.1} parent=1 // pred_check_branch
      %61 = sbr.rel (0) target = $region21
    $region20: #{tpu_custom_call.1} parent=1 // pred_region
      _
    $region21: #{tpu_custom_call.1} parent=1 // pred_fallthru
      _
    // Predicated region
    $region22: #{tpu_custom_call.1} parent=1 // pred_check
      _
    $region23: #{tpu_custom_call.1} parent=1 // pred_check_branch
      %63 = sbr.rel (0) target = $region25
    $region24: #{tpu_custom_call.1} parent=1 // pred_region
      %64 = dma.done [#allocation3], 256
    $region25: #{tpu_custom_call.1} parent=1 // pred_fallthru
      _
    // Predicated region
    $region26: #{tpu_custom_call.1} parent=1 // pred_check
      _
    $region27: #{tpu_custom_call.1} parent=1 // pred_check_branch
      %66 = sbr.rel (0) target = $region29
    $region28: #{tpu_custom_call.1} parent=1 // pred_region
      %67 = dma.done [#allocation6], 16384
    $region29: #{tpu_custom_call.1} parent=1 // pred_fallthru
      _
    // Predicated region
    $region30: #{tpu_custom_call.1} parent=1 // pred_check
      _
    $region31: #{tpu_custom_call.1} parent=1 // pred_check_branch
      %69 = sbr.rel (0) target = $region33
    $region32: #{tpu_custom_call.1} parent=1 // pred_region
      %70 = dma.done [#allocation6], 128
    $region33: #{tpu_custom_call.1} parent=1 // pred_fallthru
      _
    // Predicated region
    $region34: #{tpu_custom_call.1} parent=1 // pred_check
      _
    $region35: #{tpu_custom_call.1} parent=1 // pred_check_branch
      %72 = sbr.rel (0) target = $region37
    $region36: #{tpu_custom_call.1} parent=1 // pred_region
      %73 = dma.done [#allocation9], 16384
    $region37: #{tpu_custom_call.1} parent=1 // pred_fallthru
      _
    %v74 = vld [vmem:[#allocation2] sm:$0xff]
    %v75 = vld [vmem:[#allocation2 + $0x8] sm:$0xff]
    %v76 = vld [vmem:[#allocation5] sm:$0xff]
    %v77 = vld [vmem:[#allocation5 + $0x8] sm:$0xff]
    %v78 = vld [vmem:[#allocation5 + $0x10] sm:$0xff]
    %v79 = vld [vmem:[#allocation5 + $0x18] sm:$0xff]
    %v80 = vld [vmem:[#allocation5 + $0x20] sm:$0xff]
    %v81 = vld [vmem:[#allocation5 + $0x28] sm:$0xff]
    %v82 = vld [vmem:[#allocation5 + $0x30] sm:$0xff]
    %v83 = vld [vmem:[#allocation5 + $0x38] sm:$0xff]
    %v84 = vld [vmem:[#allocation5 + $0x40] sm:$0xff]
    %v85 = vld [vmem:[#allocation5 + $0x48] sm:$0xff]
    %v86 = vld [vmem:[#allocation5 + $0x50] sm:$0xff]
    %v87 = vld [vmem:[#allocation5 + $0x58] sm:$0xff]
    %v88 = vld [vmem:[#allocation5 + $0x60] sm:$0xff]
    %v89 = vld [vmem:[#allocation5 + $0x68] sm:$0xff]
    %v90 = vld [vmem:[#allocation5 + $0x70] sm:$0xff]
    %v91 = vld [vmem:[#allocation5 + $0x78] sm:$0xff]
    %v92 = vld [vmem:[#allocation5 + $0x80] sm:$0xff]
    %v93 = vld [vmem:[#allocation5 + $0x88] sm:$0xff]
    %v94 = vld [vmem:[#allocation5 + $0x90] sm:$0xff]
    %v95 = vld [vmem:[#allocation5 + $0x98] sm:$0xff]
    %v96 = vld [vmem:[#allocation5 + $0xa0] sm:$0xff]
    %v97 = vld [vmem:[#allocation5 + $0xa8] sm:$0xff]
    %v98 = vld [vmem:[#allocation5 + $0xb0] sm:$0xff]
    %v99 = vld [vmem:[#allocation5 + $0xb8] sm:$0xff]
    %v100 = vld [vmem:[#allocation5 + $0xc0] sm:$0xff]
    %v101 = vld [vmem:[#allocation5 + $0xc8] sm:$0xff]
    %v102 = vld [vmem:[#allocation5 + $0xd0] sm:$0xff]
    %v103 = vld [vmem:[#allocation5 + $0xd8] sm:$0xff]
    %v104 = vld [vmem:[#allocation5 + $0xe0] sm:$0xff]
    %v105 = vld [vmem:[#allocation5 + $0xe8] sm:$0xff]
    %v106 = vld [vmem:[#allocation5 + $0xf0] sm:$0xff]
    %v107 = vld [vmem:[#allocation5 + $0xf8] sm:$0xff]
    %v108 = vld [vmem:[#allocation5 + $0x100] sm:$0xff]
    %v109 = vld [vmem:[#allocation5 + $0x108] sm:$0xff]
    %v110 = vld [vmem:[#allocation5 + $0x110] sm:$0xff]
    %v111 = vld [vmem:[#allocation5 + $0x118] sm:$0xff]
    %v112 = vld [vmem:[#allocation5 + $0x120] sm:$0xff]
    %v113 = vld [vmem:[#allocation5 + $0x128] sm:$0xff]
    %v114 = vld [vmem:[#allocation5 + $0x130] sm:$0xff]
    %v115 = vld [vmem:[#allocation5 + $0x138] sm:$0xff]
    %v116 = vld [vmem:[#allocation5 + $0x140] sm:$0xff]
    %v117 = vld [vmem:[#allocation5 + $0x148] sm:$0xff]
    %v118 = vld [vmem:[#allocation5 + $0x150] sm:$0xff]
    %v119 = vld [vmem:[#allocation5 + $0x158] sm:$0xff]
    %v120 = vld [vmem:[#allocation5 + $0x160] sm:$0xff]
    %v121 = vld [vmem:[#allocation5 + $0x168] sm:$0xff]
    %v122 = vld [vmem:[#allocation5 + $0x170] sm:$0xff]
    %v123 = vld [vmem:[#allocation5 + $0x178] sm:$0xff]
    %v124 = vld [vmem:[#allocation5 + $0x180] sm:$0xff]
    %v125 = vld [vmem:[#allocation5 + $0x188] sm:$0xff]
    %v126 = vld [vmem:[#allocation5 + $0x190] sm:$0xff]
    %v127 = vld [vmem:[#allocation5 + $0x198] sm:$0xff]
    %v128 = vld [vmem:[#allocation5 + $0x1a0] sm:$0xff]
    %v129 = vld [vmem:[#allocation5 + $0x1a8] sm:$0xff]
    %v130 = vld [vmem:[#allocation5 + $0x1b0] sm:$0xff]
    %v131 = vld [vmem:[#allocation5 + $0x1b8] sm:$0xff]
    %v132 = vld [vmem:[#allocation5 + $0x1c0] sm:$0xff]
    %v133 = vld [vmem:[#allocation5 + $0x1c8] sm:$0xff]
    %v134 = vld [vmem:[#allocation5 + $0x1d0] sm:$0xff]
    %v135 = vld [vmem:[#allocation5 + $0x1d8] sm:$0xff]
    %v136 = vld [vmem:[#allocation5 + $0x1e0] sm:$0xff]
    %v137 = vld [vmem:[#allocation5 + $0x1e8] sm:$0xff]
    %v138 = vld [vmem:[#allocation5 + $0x1f0] sm:$0xff]
    %v139 = vld [vmem:[#allocation5 + $0x1f8] sm:$0xff]
    %v140 = vld [vmem:[#allocation5 + $0x200] sm:$0xff]
    %v141 = vld [vmem:[#allocation5 + $0x208] sm:$0xff]
    %v142 = vld [vmem:[#allocation5 + $0x210] sm:$0xff]
    %v143 = vld [vmem:[#allocation5 + $0x218] sm:$0xff]
    %v144 = vld [vmem:[#allocation5 + $0x220] sm:$0xff]
    %v145 = vld [vmem:[#allocation5 + $0x228] sm:$0xff]
    %v146 = vld [vmem:[#allocation5 + $0x230] sm:$0xff]
    %v147 = vld [vmem:[#allocation5 + $0x238] sm:$0xff]
    %v148 = vld [vmem:[#allocation5 + $0x240] sm:$0xff]
    %v149 = vld [vmem:[#allocation5 + $0x248] sm:$0xff]
    %v150 = vld [vmem:[#allocation5 + $0x250] sm:$0xff]
    %v151 = vld [vmem:[#allocation5 + $0x258] sm:$0xff]
    %v152 = vld [vmem:[#allocation5 + $0x260] sm:$0xff]
    %v153 = vld [vmem:[#allocation5 + $0x268] sm:$0xff]
    %v154 = vld [vmem:[#allocation5 + $0x270] sm:$0xff]
    %v155 = vld [vmem:[#allocation5 + $0x278] sm:$0xff]
    %v156 = vld [vmem:[#allocation5 + $0x280] sm:$0xff]
    %v157 = vld [vmem:[#allocation5 + $0x288] sm:$0xff]
    %v158 = vld [vmem:[#allocation5 + $0x290] sm:$0xff]
    %v159 = vld [vmem:[#allocation5 + $0x298] sm:$0xff]
    %v160 = vld [vmem:[#allocation5 + $0x2a0] sm:$0xff]
    %v161 = vld [vmem:[#allocation5 + $0x2a8] sm:$0xff]
    %v162 = vld [vmem:[#allocation5 + $0x2b0] sm:$0xff]
    %v163 = vld [vmem:[#allocation5 + $0x2b8] sm:$0xff]
    %v164 = vld [vmem:[#allocation5 + $0x2c0] sm:$0xff]
    %v165 = vld [vmem:[#allocation5 + $0x2c8] sm:$0xff]
    %v166 = vld [vmem:[#allocation5 + $0x2d0] sm:$0xff]
    %v167 = vld [vmem:[#allocation5 + $0x2d8] sm:$0xff]
    %v168 = vld [vmem:[#allocation5 + $0x2e0] sm:$0xff]
    %v169 = vld [vmem:[#allocation5 + $0x2e8] sm:$0xff]
    %v170 = vld [vmem:[#allocation5 + $0x2f0] sm:$0xff]
    %v171 = vld [vmem:[#allocation5 + $0x2f8] sm:$0xff]
    %v172 = vld [vmem:[#allocation5 + $0x300] sm:$0xff]
    %v173 = vld [vmem:[#allocation5 + $0x308] sm:$0xff]
    %v174 = vld [vmem:[#allocation5 + $0x310] sm:$0xff]
    %v175 = vld [vmem:[#allocation5 + $0x318] sm:$0xff]
    %v176 = vld [vmem:[#allocation5 + $0x320] sm:$0xff]
    %v177 = vld [vmem:[#allocation5 + $0x328] sm:$0xff]
    %v178 = vld [vmem:[#allocation5 + $0x330] sm:$0xff]
    %v179 = vld [vmem:[#allocation5 + $0x338] sm:$0xff]
    %v180 = vld [vmem:[#allocation5 + $0x340] sm:$0xff]
    %v181 = vld [vmem:[#allocation5 + $0x348] sm:$0xff]
    %v182 = vld [vmem:[#allocation5 + $0x350] sm:$0xff]
    %v183 = vld [vmem:[#allocation5 + $0x358] sm:$0xff]
    %v184 = vld [vmem:[#allocation5 + $0x360] sm:$0xff]
    %v185 = vld [vmem:[#allocation5 + $0x368] sm:$0xff]
    %v186 = vld [vmem:[#allocation5 + $0x370] sm:$0xff]
    %v187 = vld [vmem:[#allocation5 + $0x378] sm:$0xff]
    %v188 = vld [vmem:[#allocation5 + $0x380] sm:$0xff]
    %v189 = vld [vmem:[#allocation5 + $0x388] sm:$0xff]
    %v190 = vld [vmem:[#allocation5 + $0x390] sm:$0xff]
    %v191 = vld [vmem:[#allocation5 + $0x398] sm:$0xff]
    %v192 = vld [vmem:[#allocation5 + $0x3a0] sm:$0xff]
    %v193 = vld [vmem:[#allocation5 + $0x3a8] sm:$0xff]
    %v194 = vld [vmem:[#allocation5 + $0x3b0] sm:$0xff]
    %v195 = vld [vmem:[#allocation5 + $0x3b8] sm:$0xff]
    %v196 = vld [vmem:[#allocation5 + $0x3c0] sm:$0xff]
    %v197 = vld [vmem:[#allocation5 + $0x3c8] sm:$0xff]
    %v198 = vld [vmem:[#allocation5 + $0x3d0] sm:$0xff]
    %v199 = vld [vmem:[#allocation5 + $0x3d8] sm:$0xff]
    %v200 = vld [vmem:[#allocation5 + $0x3e0] sm:$0xff]
    %v201 = vld [vmem:[#allocation5 + $0x3e8] sm:$0xff]
    %v202 = vld [vmem:[#allocation5 + $0x3f0] sm:$0xff]
    %v203 = vld [vmem:[#allocation5 + $0x3f8] sm:$0xff]
    %v204 = vld [vmem:[#allocation7] sm:$0xff]
    %v206 = vlaneseq
    %v207 = vshrl.u32 %v206, 7
    %v208 = vsub.s32 0, %v207
    %v209 = vrot.slane %v204, %v208
    %v210 = vlaneseq
    %v211 = vshrl.u32 %v210, 7
    %v212 = vsub.s32 1, %v211
    %v213 = vrot.slane %v204, %v212
    %v214 = vlaneseq
    %v215 = vshrl.u32 %v214, 7
    %v216 = vsub.s32 2, %v215
    %v217 = vrot.slane %v204, %v216
    %v218 = vlaneseq
    %v219 = vshrl.u32 %v218, 7
    %v220 = vsub.s32 3, %v219
    %v221 = vrot.slane %v204, %v220
    %v222 = vlaneseq
    %v223 = vshrl.u32 %v222, 7
    %v224 = vsub.s32 4, %v223
    %v225 = vrot.slane %v204, %v224
    %v226 = vlaneseq
    %v227 = vshrl.u32 %v226, 7
    %v228 = vsub.s32 5, %v227
    %v229 = vrot.slane %v204, %v228
    %v230 = vlaneseq
    %v231 = vshrl.u32 %v230, 7
    %v232 = vsub.s32 6, %v231
    %v233 = vrot.slane %v204, %v232
    %v234 = vlaneseq
    %v235 = vshrl.u32 %v234, 7
    %v236 = vsub.s32 7, %v235
    %v237 = vrot.slane %v204, %v236
    %v248 = vunpack.c.l.b16 %v74
    %v249 = vunpack.c.h.b16 %v74
    %v250 = vunpack.c.l.b16 %v75
    %v251 = vunpack.c.h.b16 %v75
    %v252 = vpack.c.b16 %v250, %v248
    %v253 = vpack.c.b16 %v251, %v249
    %v384 = vunpack.c.l.b16 %v76
    %v385 = vunpack.c.h.b16 %v76
    %v386 = vunpack.c.l.b16 %v77
    %v387 = vunpack.c.h.b16 %v77
    %v388 = vunpack.c.l.b16 %v78
    %v389 = vunpack.c.h.b16 %v78
    %v390 = vunpack.c.l.b16 %v79
    %v391 = vunpack.c.h.b16 %v79
    %v392 = vunpack.c.l.b16 %v80
    %v393 = vunpack.c.h.b16 %v80
    %v394 = vunpack.c.l.b16 %v81
    %v395 = vunpack.c.h.b16 %v81
    %v396 = vunpack.c.l.b16 %v82
    %v397 = vunpack.c.h.b16 %v82
    %v398 = vunpack.c.l.b16 %v83
    %v399 = vunpack.c.h.b16 %v83
    %v400 = vunpack.c.l.b16 %v84
    %v401 = vunpack.c.h.b16 %v84
    %v402 = vunpack.c.l.b16 %v85
    %v403 = vunpack.c.h.b16 %v85
    %v404 = vunpack.c.l.b16 %v86
    %v405 = vunpack.c.h.b16 %v86
    %v406 = vunpack.c.l.b16 %v87
    %v407 = vunpack.c.h.b16 %v87
    %v408 = vunpack.c.l.b16 %v88
    %v409 = vunpack.c.h.b16 %v88
    %v410 = vunpack.c.l.b16 %v89
    %v411 = vunpack.c.h.b16 %v89
    %v412 = vunpack.c.l.b16 %v90
    %v413 = vunpack.c.h.b16 %v90
    %v414 = vunpack.c.l.b16 %v91
    %v415 = vunpack.c.h.b16 %v91
    %v416 = vunpack.c.l.b16 %v92
    %v417 = vunpack.c.h.b16 %v92
    %v418 = vunpack.c.l.b16 %v93
    %v419 = vunpack.c.h.b16 %v93
    %v420 = vunpack.c.l.b16 %v94
    %v421 = vunpack.c.h.b16 %v94
    %v422 = vunpack.c.l.b16 %v95
    %v423 = vunpack.c.h.b16 %v95
    %v424 = vunpack.c.l.b16 %v96
    %v425 = vunpack.c.h.b16 %v96
    %v426 = vunpack.c.l.b16 %v97
    %v427 = vunpack.c.h.b16 %v97
    %v428 = vunpack.c.l.b16 %v98
    %v429 = vunpack.c.h.b16 %v98
    %v430 = vunpack.c.l.b16 %v99
    %v431 = vunpack.c.h.b16 %v99
    %v432 = vunpack.c.l.b16 %v100
    %v433 = vunpack.c.h.b16 %v100
    %v434 = vunpack.c.l.b16 %v101
    %v435 = vunpack.c.h.b16 %v101
    %v436 = vunpack.c.l.b16 %v102
    %v437 = vunpack.c.h.b16 %v102
    %v438 = vunpack.c.l.b16 %v103
    %v439 = vunpack.c.h.b16 %v103
    %v440 = vunpack.c.l.b16 %v104
    %v441 = vunpack.c.h.b16 %v104
    %v442 = vunpack.c.l.b16 %v105
    %v443 = vunpack.c.h.b16 %v105
    %v444 = vunpack.c.l.b16 %v106
    %v445 = vunpack.c.h.b16 %v106
    %v446 = vunpack.c.l.b16 %v107
    %v447 = vunpack.c.h.b16 %v107
    %v448 = vunpack.c.l.b16 %v108
    %v449 = vunpack.c.h.b16 %v108
    %v450 = vunpack.c.l.b16 %v109
    %v451 = vunpack.c.h.b16 %v109
    %v452 = vunpack.c.l.b16 %v110
    %v453 = vunpack.c.h.b16 %v110
    %v454 = vunpack.c.l.b16 %v111
    %v455 = vunpack.c.h.b16 %v111
    %v456 = vunpack.c.l.b16 %v112
    %v457 = vunpack.c.h.b16 %v112
    %v458 = vunpack.c.l.b16 %v113
    %v459 = vunpack.c.h.b16 %v113
    %v460 = vunpack.c.l.b16 %v114
    %v461 = vunpack.c.h.b16 %v114
    %v462 = vunpack.c.l.b16 %v115
    %v463 = vunpack.c.h.b16 %v115
    %v464 = vunpack.c.l.b16 %v116
    %v465 = vunpack.c.h.b16 %v116
    %v466 = vunpack.c.l.b16 %v117
    %v467 = vunpack.c.h.b16 %v117
    %v468 = vunpack.c.l.b16 %v118
    %v469 = vunpack.c.h.b16 %v118
    %v470 = vunpack.c.l.b16 %v119
    %v471 = vunpack.c.h.b16 %v119
    %v472 = vunpack.c.l.b16 %v120
    %v473 = vunpack.c.h.b16 %v120
    %v474 = vunpack.c.l.b16 %v121
    %v475 = vunpack.c.h.b16 %v121
    %v476 = vunpack.c.l.b16 %v122
    %v477 = vunpack.c.h.b16 %v122
    %v478 = vunpack.c.l.b16 %v123
    %v479 = vunpack.c.h.b16 %v123
    %v480 = vunpack.c.l.b16 %v124
    %v481 = vunpack.c.h.b16 %v124
    %v482 = vunpack.c.l.b16 %v125
    %v483 = vunpack.c.h.b16 %v125
    %v484 = vunpack.c.l.b16 %v126
    %v485 = vunpack.c.h.b16 %v126
    %v486 = vunpack.c.l.b16 %v127
    %v487 = vunpack.c.h.b16 %v127
    %v488 = vunpack.c.l.b16 %v128
    %v489 = vunpack.c.h.b16 %v128
    %v490 = vunpack.c.l.b16 %v129
    %v491 = vunpack.c.h.b16 %v129
    %v492 = vunpack.c.l.b16 %v130
    %v493 = vunpack.c.h.b16 %v130
    %v494 = vunpack.c.l.b16 %v131
    %v495 = vunpack.c.h.b16 %v131
    %v496 = vunpack.c.l.b16 %v132
    %v497 = vunpack.c.h.b16 %v132
    %v498 = vunpack.c.l.b16 %v133
    %v499 = vunpack.c.h.b16 %v133
    %v500 = vunpack.c.l.b16 %v134
    %v501 = vunpack.c.h.b16 %v134
    %v502 = vunpack.c.l.b16 %v135
    %v503 = vunpack.c.h.b16 %v135
    %v504 = vunpack.c.l.b16 %v136
    %v505 = vunpack.c.h.b16 %v136
    %v506 = vunpack.c.l.b16 %v137
    %v507 = vunpack.c.h.b16 %v137
    %v508 = vunpack.c.l.b16 %v138
    %v509 = vunpack.c.h.b16 %v138
    %v510 = vunpack.c.l.b16 %v139
    %v511 = vunpack.c.h.b16 %v139
    %v512 = vunpack.c.l.b16 %v140
    %v513 = vunpack.c.h.b16 %v140
    %v514 = vunpack.c.l.b16 %v141
    %v515 = vunpack.c.h.b16 %v141
    %v516 = vunpack.c.l.b16 %v142
    %v517 = vunpack.c.h.b16 %v142
    %v518 = vunpack.c.l.b16 %v143
    %v519 = vunpack.c.h.b16 %v143
    %v520 = vunpack.c.l.b16 %v144
    %v521 = vunpack.c.h.b16 %v144
    %v522 = vunpack.c.l.b16 %v145
    %v523 = vunpack.c.h.b16 %v145
    %v524 = vunpack.c.l.b16 %v146
    %v525 = vunpack.c.h.b16 %v146
    %v526 = vunpack.c.l.b16 %v147
    %v527 = vunpack.c.h.b16 %v147
    %v528 = vunpack.c.l.b16 %v148
    %v529 = vunpack.c.h.b16 %v148
    %v530 = vunpack.c.l.b16 %v149
    %v531 = vunpack.c.h.b16 %v149
    %v532 = vunpack.c.l.b16 %v150
    %v533 = vunpack.c.h.b16 %v150
    %v534 = vunpack.c.l.b16 %v151
    %v535 = vunpack.c.h.b16 %v151
    %v536 = vunpack.c.l.b16 %v152
    %v537 = vunpack.c.h.b16 %v152
    %v538 = vunpack.c.l.b16 %v153
    %v539 = vunpack.c.h.b16 %v153
    %v540 = vunpack.c.l.b16 %v154
    %v541 = vunpack.c.h.b16 %v154
    %v542 = vunpack.c.l.b16 %v155
    %v543 = vunpack.c.h.b16 %v155
    %v544 = vunpack.c.l.b16 %v156
    %v545 = vunpack.c.h.b16 %v156
    %v546 = vunpack.c.l.b16 %v157
    %v547 = vunpack.c.h.b16 %v157
    %v548 = vunpack.c.l.b16 %v158
    %v549 = vunpack.c.h.b16 %v158
    %v550 = vunpack.c.l.b16 %v159
    %v551 = vunpack.c.h.b16 %v159
    %v552 = vunpack.c.l.b16 %v160
    %v553 = vunpack.c.h.b16 %v160
    %v554 = vunpack.c.l.b16 %v161
    %v555 = vunpack.c.h.b16 %v161
    %v556 = vunpack.c.l.b16 %v162
    %v557 = vunpack.c.h.b16 %v162
    %v558 = vunpack.c.l.b16 %v163
    %v559 = vunpack.c.h.b16 %v163
    %v560 = vunpack.c.l.b16 %v164
    %v561 = vunpack.c.h.b16 %v164
    %v562 = vunpack.c.l.b16 %v165
    %v563 = vunpack.c.h.b16 %v165
    %v564 = vunpack.c.l.b16 %v166
    %v565 = vunpack.c.h.b16 %v166
    %v566 = vunpack.c.l.b16 %v167
    %v567 = vunpack.c.h.b16 %v167
    %v568 = vunpack.c.l.b16 %v168
    %v569 = vunpack.c.h.b16 %v168
    %v570 = vunpack.c.l.b16 %v169
    %v571 = vunpack.c.h.b16 %v169
    %v572 = vunpack.c.l.b16 %v170
    %v573 = vunpack.c.h.b16 %v170
    %v574 = vunpack.c.l.b16 %v171
    %v575 = vunpack.c.h.b16 %v171
    %v576 = vunpack.c.l.b16 %v172
    %v577 = vunpack.c.h.b16 %v172
    %v578 = vunpack.c.l.b16 %v173
    %v579 = vunpack.c.h.b16 %v173
    %v580 = vunpack.c.l.b16 %v174
    %v581 = vunpack.c.h.b16 %v174
    %v582 = vunpack.c.l.b16 %v175
    %v583 = vunpack.c.h.b16 %v175
    %v584 = vunpack.c.l.b16 %v176
    %v585 = vunpack.c.h.b16 %v176
    %v586 = vunpack.c.l.b16 %v177
    %v587 = vunpack.c.h.b16 %v177
    %v588 = vunpack.c.l.b16 %v178
    %v589 = vunpack.c.h.b16 %v178
    %v590 = vunpack.c.l.b16 %v179
    %v591 = vunpack.c.h.b16 %v179
    %v592 = vunpack.c.l.b16 %v180
    %v593 = vunpack.c.h.b16 %v180
    %v594 = vunpack.c.l.b16 %v181
    %v595 = vunpack.c.h.b16 %v181
    %v596 = vunpack.c.l.b16 %v182
    %v597 = vunpack.c.h.b16 %v182
    %v598 = vunpack.c.l.b16 %v183
    %v599 = vunpack.c.h.b16 %v183
    %v600 = vunpack.c.l.b16 %v184
    %v601 = vunpack.c.h.b16 %v184
    %v602 = vunpack.c.l.b16 %v185
    %v603 = vunpack.c.h.b16 %v185
    %v604 = vunpack.c.l.b16 %v186
    %v605 = vunpack.c.h.b16 %v186
    %v606 = vunpack.c.l.b16 %v187
    %v607 = vunpack.c.h.b16 %v187
    %v608 = vunpack.c.l.b16 %v188
    %v609 = vunpack.c.h.b16 %v188
    %v610 = vunpack.c.l.b16 %v189
    %v611 = vunpack.c.h.b16 %v189
    %v612 = vunpack.c.l.b16 %v190
    %v613 = vunpack.c.h.b16 %v190
    %v614 = vunpack.c.l.b16 %v191
    %v615 = vunpack.c.h.b16 %v191
    %v616 = vunpack.c.l.b16 %v192
    %v617 = vunpack.c.h.b16 %v192
    %v618 = vunpack.c.l.b16 %v193
    %v619 = vunpack.c.h.b16 %v193
    %v620 = vunpack.c.l.b16 %v194
    %v621 = vunpack.c.h.b16 %v194
    %v622 = vunpack.c.l.b16 %v195
    %v623 = vunpack.c.h.b16 %v195
    %v624 = vunpack.c.l.b16 %v196
    %v625 = vunpack.c.h.b16 %v196
    %v626 = vunpack.c.l.b16 %v197
    %v627 = vunpack.c.h.b16 %v197
    %v628 = vunpack.c.l.b16 %v198
    %v629 = vunpack.c.h.b16 %v198
    %v630 = vunpack.c.l.b16 %v199
    %v631 = vunpack.c.h.b16 %v199
    %v632 = vunpack.c.l.b16 %v200
    %v633 = vunpack.c.h.b16 %v200
    %v634 = vunpack.c.l.b16 %v201
    %v635 = vunpack.c.h.b16 %v201
    %v636 = vunpack.c.l.b16 %v202
    %v637 = vunpack.c.h.b16 %v202
    %v638 = vunpack.c.l.b16 %v203
    %v639 = vunpack.c.h.b16 %v203
    %v640 = vpack.c.b16 %v392, %v384
    %v641 = vpack.c.b16 %v393, %v385
    %v642 = vpack.c.b16 %v394, %v386
    %v643 = vpack.c.b16 %v395, %v387
    %v644 = vpack.c.b16 %v396, %v388
    %v645 = vpack.c.b16 %v397, %v389
    %v646 = vpack.c.b16 %v398, %v390
    %v647 = vpack.c.b16 %v399, %v391
    %v648 = vpack.c.b16 %v408, %v400
    %v649 = vpack.c.b16 %v409, %v401
    %v650 = vpack.c.b16 %v410, %v402
    %v651 = vpack.c.b16 %v411, %v403
    %v652 = vpack.c.b16 %v412, %v404
    %v653 = vpack.c.b16 %v413, %v405
    %v654 = vpack.c.b16 %v414, %v406
    %v655 = vpack.c.b16 %v415, %v407
    %v656 = vpack.c.b16 %v424, %v416
    %v657 = vpack.c.b16 %v425, %v417
    %v658 = vpack.c.b16 %v426, %v418
    %v659 = vpack.c.b16 %v427, %v419
    %v660 = vpack.c.b16 %v428, %v420
    %v661 = vpack.c.b16 %v429, %v421
    %v662 = vpack.c.b16 %v430, %v422
    %v663 = vpack.c.b16 %v431, %v423
    %v664 = vpack.c.b16 %v440, %v432
    %v665 = vpack.c.b16 %v441, %v433
    %v666 = vpack.c.b16 %v442, %v434
    %v667 = vpack.c.b16 %v443, %v435
    %v668 = vpack.c.b16 %v444, %v436
    %v669 = vpack.c.b16 %v445, %v437
    %v670 = vpack.c.b16 %v446, %v438
    %v671 = vpack.c.b16 %v447, %v439
    %v672 = vpack.c.b16 %v456, %v448
    %v673 = vpack.c.b16 %v457, %v449
    %v674 = vpack.c.b16 %v458, %v450
    %v675 = vpack.c.b16 %v459, %v451
    %v676 = vpack.c.b16 %v460, %v452
    %v677 = vpack.c.b16 %v461, %v453
    %v678 = vpack.c.b16 %v462, %v454
    %v679 = vpack.c.b16 %v463, %v455
    %v680 = vpack.c.b16 %v472, %v464
    %v681 = vpack.c.b16 %v473, %v465
    %v682 = vpack.c.b16 %v474, %v466
    %v683 = vpack.c.b16 %v475, %v467
    %v684 = vpack.c.b16 %v476, %v468
    %v685 = vpack.c.b16 %v477, %v469
    %v686 = vpack.c.b16 %v478, %v470
    %v687 = vpack.c.b16 %v479, %v471
    %v688 = vpack.c.b16 %v488, %v480
    %v689 = vpack.c.b16 %v489, %v481
    %v690 = vpack.c.b16 %v490, %v482
    %v691 = vpack.c.b16 %v491, %v483
    %v692 = vpack.c.b16 %v492, %v484
    %v693 = vpack.c.b16 %v493, %v485
    %v694 = vpack.c.b16 %v494, %v486
    %v695 = vpack.c.b16 %v495, %v487
    %v696 = vpack.c.b16 %v504, %v496
    %v697 = vpack.c.b16 %v505, %v497
    %v698 = vpack.c.b16 %v506, %v498
    %v699 = vpack.c.b16 %v507, %v499
    %v700 = vpack.c.b16 %v508, %v500
    %v701 = vpack.c.b16 %v509, %v501
    %v702 = vpack.c.b16 %v510, %v502
    %v703 = vpack.c.b16 %v511, %v503
    %v704 = vpack.c.b16 %v520, %v512
    %v705 = vpack.c.b16 %v521, %v513
    %v706 = vpack.c.b16 %v522, %v514
    %v707 = vpack.c.b16 %v523, %v515
    %v708 = vpack.c.b16 %v524, %v516
    %v709 = vpack.c.b16 %v525, %v517
    %v710 = vpack.c.b16 %v526, %v518
    %v711 = vpack.c.b16 %v527, %v519
    %v712 = vpack.c.b16 %v536, %v528
    %v713 = vpack.c.b16 %v537, %v529
    %v714 = vpack.c.b16 %v538, %v530
    %v715 = vpack.c.b16 %v539, %v531
    %v716 = vpack.c.b16 %v540, %v532
    %v717 = vpack.c.b16 %v541, %v533
    %v718 = vpack.c.b16 %v542, %v534
    %v719 = vpack.c.b16 %v543, %v535
    %v720 = vpack.c.b16 %v552, %v544
    %v721 = vpack.c.b16 %v553, %v545
    %v722 = vpack.c.b16 %v554, %v546
    %v723 = vpack.c.b16 %v555, %v547
    %v724 = vpack.c.b16 %v556, %v548
    %v725 = vpack.c.b16 %v557, %v549
    %v726 = vpack.c.b16 %v558, %v550
    %v727 = vpack.c.b16 %v559, %v551
    %v728 = vpack.c.b16 %v568, %v560
    %v729 = vpack.c.b16 %v569, %v561
    %v730 = vpack.c.b16 %v570, %v562
    %v731 = vpack.c.b16 %v571, %v563
    %v732 = vpack.c.b16 %v572, %v564
    %v733 = vpack.c.b16 %v573, %v565
    %v734 = vpack.c.b16 %v574, %v566
    %v735 = vpack.c.b16 %v575, %v567
    %v736 = vpack.c.b16 %v584, %v576
    %v737 = vpack.c.b16 %v585, %v577
    %v738 = vpack.c.b16 %v586, %v578
    %v739 = vpack.c.b16 %v587, %v579
    %v740 = vpack.c.b16 %v588, %v580
    %v741 = vpack.c.b16 %v589, %v581
    %v742 = vpack.c.b16 %v590, %v582
    %v743 = vpack.c.b16 %v591, %v583
    %v744 = vpack.c.b16 %v600, %v592
    %v745 = vpack.c.b16 %v601, %v593
    %v746 = vpack.c.b16 %v602, %v594
    %v747 = vpack.c.b16 %v603, %v595
    %v748 = vpack.c.b16 %v604, %v596
    %v749 = vpack.c.b16 %v605, %v597
    %v750 = vpack.c.b16 %v606, %v598
    %v751 = vpack.c.b16 %v607, %v599
    %v752 = vpack.c.b16 %v616, %v608
    %v753 = vpack.c.b16 %v617, %v609
    %v754 = vpack.c.b16 %v618, %v610
    %v755 = vpack.c.b16 %v619, %v611
    %v756 = vpack.c.b16 %v620, %v612
    %v757 = vpack.c.b16 %v621, %v613
    %v758 = vpack.c.b16 %v622, %v614
    %v759 = vpack.c.b16 %v623, %v615
    %v760 = vpack.c.b16 %v632, %v624
    %v761 = vpack.c.b16 %v633, %v625
    %v762 = vpack.c.b16 %v634, %v626
    %v763 = vpack.c.b16 %v635, %v627
    %v764 = vpack.c.b16 %v636, %v628
    %v765 = vpack.c.b16 %v637, %v629
    %v766 = vpack.c.b16 %v638, %v630
    %v767 = vpack.c.b16 %v639, %v631
    %896 = vmatprep.subr.bf16.mxu0 %v697
    %897 = vmatpush1.bf16.msra.mxu0 %v696
    %898 = vmatprep.subr.bf16.mxu0 %v689
    %899 = vmatpush1.bf16.msra.mxu0 %v688
    %900 = vmatprep.subr.bf16.mxu0 %v681
    %901 = vmatpush1.bf16.msra.mxu0 %v680
    %902 = vmatprep.subr.bf16.mxu0 %v673
    %903 = vmatpush1.bf16.msra.mxu0 %v672
    %904 = vmatprep.subr.bf16.mxu0 %v665
    %905 = vmatpush1.bf16.msra.mxu0 %v664
    %906 = vmatprep.subr.bf16.mxu0 %v657
    %907 = vmatpush1.bf16.msra.mxu0 %v656
    %908 = vmatprep.subr.bf16.mxu0 %v649
    %909 = vmatpush1.bf16.msra.mxu0 %v648
    %910 = vmatprep.subr.bf16.mxu0 %v641
    %911 = vmatpush1.bf16.msra.mxu0 %v640
    %912 = vmatprep.subr.bf16.mxu0 %v761
    %913 = vmatpush2.bf16.msra.mxu0 %v760
    %914 = vmatprep.subr.bf16.mxu0 %v753
    %915 = vmatpush2.bf16.msra.mxu0 %v752
    %916 = vmatprep.subr.bf16.mxu0 %v745
    %917 = vmatpush2.bf16.msra.mxu0 %v744
    %918 = vmatprep.subr.bf16.mxu0 %v737
    %919 = vmatpush2.bf16.msra.mxu0 %v736
    %920 = vmatprep.subr.bf16.mxu0 %v729
    %921 = vmatpush2.bf16.msra.mxu0 %v728
    %922 = vmatprep.subr.bf16.mxu0 %v721
    %923 = vmatpush2.bf16.msra.mxu0 %v720
    %924 = vmatprep.subr.bf16.mxu0 %v713
    %925 = vmatpush2.bf16.msra.mxu0 %v712
    %926 = vmatprep.subr.bf16.mxu0 %v705
    %927 = vmatpush2.bf16.msra.mxu0 %v704
    %928 = vmatprep.mubr.bf16.mxu0 %v253
    %929 = vmatmul.mubr.bf16.gmra.mxu0 %v252
    %v930 = vpop.f32.mrf.mxu0
    %v931 = vadd.f32 %v209, %v930
    %v932 = vpop.f32.mrf.mxu0
    %v933 = vadd.f32 %v213, %v932
    %v934 = vpop.f32.mrf.mxu0
    %v935 = vadd.f32 %v209, %v934
    %v936 = vpop.f32.mrf.mxu0
    %v937 = vadd.f32 %v213, %v936
    %938 = vdwg.mxu0
    %939 = vmatprep.subr.bf16.mxu0 %v699
    %940 = vmatpush1.bf16.msra.mxu0 %v698
    %941 = vmatprep.subr.bf16.mxu0 %v691
    %942 = vmatpush1.bf16.msra.mxu0 %v690
    %943 = vmatprep.subr.bf16.mxu0 %v683
    %944 = vmatpush1.bf16.msra.mxu0 %v682
    %945 = vmatprep.subr.bf16.mxu0 %v675
    %946 = vmatpush1.bf16.msra.mxu0 %v674
    %947 = vmatprep.subr.bf16.mxu0 %v667
    %948 = vmatpush1.bf16.msra.mxu0 %v666
    %949 = vmatprep.subr.bf16.mxu0 %v659
    %950 = vmatpush1.bf16.msra.mxu0 %v658
    %951 = vmatprep.subr.bf16.mxu0 %v651
    %952 = vmatpush1.bf16.msra.mxu0 %v650
    %953 = vmatprep.subr.bf16.mxu0 %v643
    %954 = vmatpush1.bf16.msra.mxu0 %v642
    %955 = vmatprep.subr.bf16.mxu0 %v763
    %956 = vmatpush2.bf16.msra.mxu0 %v762
    %957 = vmatprep.subr.bf16.mxu0 %v755
    %958 = vmatpush2.bf16.msra.mxu0 %v754
    %959 = vmatprep.subr.bf16.mxu0 %v747
    %960 = vmatpush2.bf16.msra.mxu0 %v746
    %961 = vmatprep.subr.bf16.mxu0 %v739
    %962 = vmatpush2.bf16.msra.mxu0 %v738
    %963 = vmatprep.subr.bf16.mxu0 %v731
    %964 = vmatpush2.bf16.msra.mxu0 %v730
    %965 = vmatprep.subr.bf16.mxu0 %v723
    %966 = vmatpush2.bf16.msra.mxu0 %v722
    %967 = vmatprep.subr.bf16.mxu0 %v715
    %968 = vmatpush2.bf16.msra.mxu0 %v714
    %969 = vmatprep.subr.bf16.mxu0 %v707
    %970 = vmatpush2.bf16.msra.mxu0 %v706
    %971 = vmatprep.mubr.bf16.mxu0 %v253
    %972 = vmatmul.mubr.bf16.gmra.mxu0 %v252
    %v973 = vpop.f32.mrf.mxu0
    %v974 = vadd.f32 %v217, %v973
    %v975 = vpop.f32.mrf.mxu0
    %v976 = vadd.f32 %v221, %v975
    %v977 = vpop.f32.mrf.mxu0
    %v978 = vadd.f32 %v217, %v977
    %v979 = vpop.f32.mrf.mxu0
    %v980 = vadd.f32 %v221, %v979
    %981 = vdwg.mxu0
    %982 = vmatprep.subr.bf16.mxu0 %v701
    %983 = vmatpush1.bf16.msra.mxu0 %v700
    %984 = vmatprep.subr.bf16.mxu0 %v693
    %985 = vmatpush1.bf16.msra.mxu0 %v692
    %986 = vmatprep.subr.bf16.mxu0 %v685
    %987 = vmatpush1.bf16.msra.mxu0 %v684
    %988 = vmatprep.subr.bf16.mxu0 %v677
    %989 = vmatpush1.bf16.msra.mxu0 %v676
    %990 = vmatprep.subr.bf16.mxu0 %v669
    %991 = vmatpush1.bf16.msra.mxu0 %v668
    %992 = vmatprep.subr.bf16.mxu0 %v661
    %993 = vmatpush1.bf16.msra.mxu0 %v660
    %994 = vmatprep.subr.bf16.mxu0 %v653
    %995 = vmatpush1.bf16.msra.mxu0 %v652
    %996 = vmatprep.subr.bf16.mxu0 %v645
    %997 = vmatpush1.bf16.msra.mxu0 %v644
    %998 = vmatprep.subr.bf16.mxu0 %v765
    %999 = vmatpush2.bf16.msra.mxu0 %v764
    %1000 = vmatprep.subr.bf16.mxu0 %v757
    %1001 = vmatpush2.bf16.msra.mxu0 %v756
    %1002 = vmatprep.subr.bf16.mxu0 %v749
    %1003 = vmatpush2.bf16.msra.mxu0 %v748
    %1004 = vmatprep.subr.bf16.mxu0 %v741
    %1005 = vmatpush2.bf16.msra.mxu0 %v740
    %1006 = vmatprep.subr.bf16.mxu0 %v733
    %1007 = vmatpush2.bf16.msra.mxu0 %v732
    %1008 = vmatprep.subr.bf16.mxu0 %v725
    %1009 = vmatpush2.bf16.msra.mxu0 %v724
    %1010 = vmatprep.subr.bf16.mxu0 %v717
    %1011 = vmatpush2.bf16.msra.mxu0 %v716
    %1012 = vmatprep.subr.bf16.mxu0 %v709
    %1013 = vmatpush2.bf16.msra.mxu0 %v708
    %1014 = vmatprep.mubr.bf16.mxu0 %v253
    %1015 = vmatmul.mubr.bf16.gmra.mxu0 %v252
    %v1016 = vpop.f32.mrf.mxu0
    %v1017 = vadd.f32 %v225, %v1016
    %v1018 = vpop.f32.mrf.mxu0
    %v1019 = vadd.f32 %v229, %v1018
    %v1020 = vpop.f32.mrf.mxu0
    %v1021 = vadd.f32 %v225, %v1020
    %v1022 = vpop.f32.mrf.mxu0
    %v1023 = vadd.f32 %v229, %v1022
    %1024 = vdwg.mxu0
    %1025 = vmatprep.subr.bf16.mxu0 %v703
    %1026 = vmatpush1.bf16.msra.mxu0 %v702
    %1027 = vmatprep.subr.bf16.mxu0 %v695
    %1028 = vmatpush1.bf16.msra.mxu0 %v694
    %1029 = vmatprep.subr.bf16.mxu0 %v687
    %1030 = vmatpush1.bf16.msra.mxu0 %v686
    %1031 = vmatprep.subr.bf16.mxu0 %v679
    %1032 = vmatpush1.bf16.msra.mxu0 %v678
    %1033 = vmatprep.subr.bf16.mxu0 %v671
    %1034 = vmatpush1.bf16.msra.mxu0 %v670
    %1035 = vmatprep.subr.bf16.mxu0 %v663
    %1036 = vmatpush1.bf16.msra.mxu0 %v662
    %1037 = vmatprep.subr.bf16.mxu0 %v655
    %1038 = vmatpush1.bf16.msra.mxu0 %v654
    %1039 = vmatprep.subr.bf16.mxu0 %v647
    %1040 = vmatpush1.bf16.msra.mxu0 %v646
    %1041 = vmatprep.subr.bf16.mxu0 %v767
    %1042 = vmatpush2.bf16.msra.mxu0 %v766
    %1043 = vmatprep.subr.bf16.mxu0 %v759
    %1044 = vmatpush2.bf16.msra.mxu0 %v758
    %1045 = vmatprep.subr.bf16.mxu0 %v751
    %1046 = vmatpush2.bf16.msra.mxu0 %v750
    %1047 = vmatprep.subr.bf16.mxu0 %v743
    %1048 = vmatpush2.bf16.msra.mxu0 %v742
    %1049 = vmatprep.subr.bf16.mxu0 %v735
    %1050 = vmatpush2.bf16.msra.mxu0 %v734
    %1051 = vmatprep.subr.bf16.mxu0 %v727
    %1052 = vmatpush2.bf16.msra.mxu0 %v726
    %1053 = vmatprep.subr.bf16.mxu0 %v719
    %1054 = vmatpush2.bf16.msra.mxu0 %v718
    %1055 = vmatprep.subr.bf16.mxu0 %v711
    %1056 = vmatpush2.bf16.msra.mxu0 %v710
    %1057 = vmatprep.mubr.bf16.mxu0 %v253
    %1058 = vmatmul.mubr.bf16.gmra.mxu0 %v252
    %v1059 = vpop.f32.mrf.mxu0
    %v1060 = vadd.f32 %v233, %v1059
    %v1061 = vpop.f32.mrf.mxu0
    %v1062 = vadd.f32 %v237, %v1061
    %v1063 = vpop.f32.mrf.mxu0
    %v1064 = vadd.f32 %v233, %v1063
    %v1065 = vpop.f32.mrf.mxu0
    %v1066 = vadd.f32 %v237, %v1065
    %1067 = vdwg.mxu0
    %v1068 = vmul.f32 %v931, %v931
    %v1069 = vmul.f32 %v933, %v933
    %v1070 = vmul.f32 %v974, %v974
    %v1071 = vmul.f32 %v976, %v976
    %v1072 = vmul.f32 %v1017, %v1017
    %v1073 = vmul.f32 %v1019, %v1019
    %v1074 = vmul.f32 %v1060, %v1060
    %v1075 = vmul.f32 %v1062, %v1062
    %v1076 = vmul.f32 %v935, %v935
    %v1077 = vmul.f32 %v937, %v937
    %v1078 = vmul.f32 %v978, %v978
    %v1079 = vmul.f32 %v980, %v980
    %v1080 = vmul.f32 %v1021, %v1021
    %v1081 = vmul.f32 %v1023, %v1023
    %v1082 = vmul.f32 %v1064, %v1064
    %v1083 = vmul.f32 %v1066, %v1066
    %v1084 = vmul.f32 %v931, %v1068
    %v1085 = vmul.f32 %v933, %v1069
    %v1086 = vmul.f32 %v974, %v1070
    %v1087 = vmul.f32 %v976, %v1071
    %v1088 = vmul.f32 %v1017, %v1072
    %v1089 = vmul.f32 %v1019, %v1073
    %v1090 = vmul.f32 %v1060, %v1074
    %v1091 = vmul.f32 %v1062, %v1075
    %v1092 = vmul.f32 %v935, %v1076
    %v1093 = vmul.f32 %v937, %v1077
    %v1094 = vmul.f32 %v978, %v1078
    %v1095 = vmul.f32 %v980, %v1079
    %v1096 = vmul.f32 %v1021, %v1080
    %v1097 = vmul.f32 %v1023, %v1081
    %v1098 = vmul.f32 %v1064, %v1082
    %v1099 = vmul.f32 %v1066, %v1083
    %v1100 = vmul.f32 %v1084, 0.044715
    %v1101 = vmul.f32 %v1085, 0.044715
    %v1102 = vmul.f32 %v1086, 0.044715
    %v1103 = vmul.f32 %v1087, 0.044715
    %v1104 = vmul.f32 %v1088, 0.044715
    %v1105 = vmul.f32 %v1089, 0.044715
    %v1106 = vmul.f32 %v1090, 0.044715
    %v1107 = vmul.f32 %v1091, 0.044715
    %v1108 = vmul.f32 %v1092, 0.044715
    %v1109 = vmul.f32 %v1093, 0.044715
    %v1110 = vmul.f32 %v1094, 0.044715
    %v1111 = vmul.f32 %v1095, 0.044715
    %v1112 = vmul.f32 %v1096, 0.044715
    %v1113 = vmul.f32 %v1097, 0.044715
    %v1114 = vmul.f32 %v1098, 0.044715
    %v1115 = vmul.f32 %v1099, 0.044715
    %v1116 = vadd.f32 %v931, %v1100
    %v1117 = vadd.f32 %v933, %v1101
    %v1118 = vadd.f32 %v974, %v1102
    %v1119 = vadd.f32 %v976, %v1103
    %v1120 = vadd.f32 %v1017, %v1104
    %v1121 = vadd.f32 %v1019, %v1105
    %v1122 = vadd.f32 %v1060, %v1106
    %v1123 = vadd.f32 %v1062, %v1107
    %v1124 = vadd.f32 %v935, %v1108
    %v1125 = vadd.f32 %v937, %v1109
    %v1126 = vadd.f32 %v978, %v1110
    %v1127 = vadd.f32 %v980, %v1111
    %v1128 = vadd.f32 %v1021, %v1112
    %v1129 = vadd.f32 %v1023, %v1113
    %v1130 = vadd.f32 %v1064, %v1114
    %v1131 = vadd.f32 %v1066, %v1115
    %v1132 = vmul.f32 %v1116, 0.7978846
    %v1133 = vmul.f32 %v1117, 0.7978846
    %v1134 = vmul.f32 %v1118, 0.7978846
    %v1135 = vmul.f32 %v1119, 0.7978846
    %v1136 = vmul.f32 %v1120, 0.7978846
    %v1137 = vmul.f32 %v1121, 0.7978846
    %v1138 = vmul.f32 %v1122, 0.7978846
    %v1139 = vmul.f32 %v1123, 0.7978846
    %v1140 = vmul.f32 %v1124, 0.7978846
    %v1141 = vmul.f32 %v1125, 0.7978846
    %v1142 = vmul.f32 %v1126, 0.7978846
    %v1143 = vmul.f32 %v1127, 0.7978846
    %v1144 = vmul.f32 %v1128, 0.7978846
    %v1145 = vmul.f32 %v1129, 0.7978846
    %v1146 = vmul.f32 %v1130, 0.7978846
    %v1147 = vmul.f32 %v1131, 0.7978846
    %v1148 = vtanh.pop %v1132
    %v1149 = vtanh.pop %v1133
    %v1150 = vtanh.pop %v1134
    %v1151 = vtanh.pop %v1135
    %v1152 = vtanh.pop %v1136
    %v1153 = vtanh.pop %v1137
    %v1154 = vtanh.pop %v1138
    %v1155 = vtanh.pop %v1139
    %v1156 = vtanh.pop %v1140
    %v1157 = vtanh.pop %v1141
    %v1158 = vtanh.pop %v1142
    %v1159 = vtanh.pop %v1143
    %v1160 = vtanh.pop %v1144
    %v1161 = vtanh.pop %v1145
    %v1162 = vtanh.pop %v1146
    %v1163 = vtanh.pop %v1147
    %v1164 = vadd.f32 %v1148, 1.0
    %v1165 = vadd.f32 %v1149, 1.0
    %v1166 = vadd.f32 %v1150, 1.0
    %v1167 = vadd.f32 %v1151, 1.0
    %v1168 = vadd.f32 %v1152, 1.0
    %v1169 = vadd.f32 %v1153, 1.0
    %v1170 = vadd.f32 %v1154, 1.0
    %v1171 = vadd.f32 %v1155, 1.0
    %v1172 = vadd.f32 %v1156, 1.0
    %v1173 = vadd.f32 %v1157, 1.0
    %v1174 = vadd.f32 %v1158, 1.0
    %v1175 = vadd.f32 %v1159, 1.0
    %v1176 = vadd.f32 %v1160, 1.0
    %v1177 = vadd.f32 %v1161, 1.0
    %v1178 = vadd.f32 %v1162, 1.0
    %v1179 = vadd.f32 %v1163, 1.0
    %v1180 = vmul.f32 %v1164, 0.5
    %v1181 = vmul.f32 %v1165, 0.5
    %v1182 = vmul.f32 %v1166, 0.5
    %v1183 = vmul.f32 %v1167, 0.5
    %v1184 = vmul.f32 %v1168, 0.5
    %v1185 = vmul.f32 %v1169, 0.5
    %v1186 = vmul.f32 %v1170, 0.5
    %v1187 = vmul.f32 %v1171, 0.5
    %v1188 = vmul.f32 %v1172, 0.5
    %v1189 = vmul.f32 %v1173, 0.5
    %v1190 = vmul.f32 %v1174, 0.5
    %v1191 = vmul.f32 %v1175, 0.5
    %v1192 = vmul.f32 %v1176, 0.5
    %v1193 = vmul.f32 %v1177, 0.5
    %v1194 = vmul.f32 %v1178, 0.5
    %v1195 = vmul.f32 %v1179, 0.5
    %v1196 = vmul.f32 %v931, %v1180
    %v1197 = vmul.f32 %v933, %v1181
    %v1198 = vmul.f32 %v974, %v1182
    %v1199 = vmul.f32 %v976, %v1183
    %v1200 = vmul.f32 %v1017, %v1184
    %v1201 = vmul.f32 %v1019, %v1185
    %v1202 = vmul.f32 %v1060, %v1186
    %v1203 = vmul.f32 %v1062, %v1187
    %v1204 = vmul.f32 %v935, %v1188
    %v1205 = vmul.f32 %v937, %v1189
    %v1206 = vmul.f32 %v978, %v1190
    %v1207 = vmul.f32 %v980, %v1191
    %v1208 = vmul.f32 %v1021, %v1192
    %v1209 = vmul.f32 %v1023, %v1193
    %v1210 = vmul.f32 %v1064, %v1194
    %v1211 = vmul.f32 %v1066, %v1195
    %v1212 = vpack.c.bf16 %v1204, %v1196
    %v1213 = vpack.c.bf16 %v1205, %v1197
    %v1214 = vpack.c.bf16 %v1206, %v1198
    %v1215 = vpack.c.bf16 %v1207, %v1199
    %v1216 = vpack.c.bf16 %v1208, %v1200
    %v1217 = vpack.c.bf16 %v1209, %v1201
    %v1218 = vpack.c.bf16 %v1210, %v1202
    %v1219 = vpack.c.bf16 %v1211, %v1203
    %v1220 = vld [vmem:[#allocation8] sm:$0xff]
    %v1221 = vld [vmem:[#allocation8 + $0x8] sm:$0xff]
    %v1222 = vld [vmem:[#allocation8 + $0x10] sm:$0xff]
    %v1223 = vld [vmem:[#allocation8 + $0x18] sm:$0xff]
    %v1224 = vld [vmem:[#allocation8 + $0x20] sm:$0xff]
    %v1225 = vld [vmem:[#allocation8 + $0x28] sm:$0xff]
    %v1226 = vld [vmem:[#allocation8 + $0x30] sm:$0xff]
    %v1227 = vld [vmem:[#allocation8 + $0x38] sm:$0xff]
    %v1228 = vld [vmem:[#allocation8 + $0x40] sm:$0xff]
    %v1229 = vld [vmem:[#allocation8 + $0x48] sm:$0xff]
    %v1230 = vld [vmem:[#allocation8 + $0x50] sm:$0xff]
    %v1231 = vld [vmem:[#allocation8 + $0x58] sm:$0xff]
    %v1232 = vld [vmem:[#allocation8 + $0x60] sm:$0xff]
    %v1233 = vld [vmem:[#allocation8 + $0x68] sm:$0xff]
    %v1234 = vld [vmem:[#allocation8 + $0x70] sm:$0xff]
    %v1235 = vld [vmem:[#allocation8 + $0x78] sm:$0xff]
    %v1236 = vld [vmem:[#allocation8 + $0x80] sm:$0xff]
    %v1237 = vld [vmem:[#allocation8 + $0x88] sm:$0xff]
    %v1238 = vld [vmem:[#allocation8 + $0x90] sm:$0xff]
    %v1239 = vld [vmem:[#allocation8 + $0x98] sm:$0xff]
    %v1240 = vld [vmem:[#allocation8 + $0xa0] sm:$0xff]
    %v1241 = vld [vmem:[#allocation8 + $0xa8] sm:$0xff]
    %v1242 = vld [vmem:[#allocation8 + $0xb0] sm:$0xff]
    %v1243 = vld [vmem:[#allocation8 + $0xb8] sm:$0xff]
    %v1244 = vld [vmem:[#allocation8 + $0xc0] sm:$0xff]
    %v1245 = vld [vmem:[#allocation8 + $0xc8] sm:$0xff]
    %v1246 = vld [vmem:[#allocation8 + $0xd0] sm:$0xff]
    %v1247 = vld [vmem:[#allocation8 + $0xd8] sm:$0xff]
    %v1248 = vld [vmem:[#allocation8 + $0xe0] sm:$0xff]
    %v1249 = vld [vmem:[#allocation8 + $0xe8] sm:$0xff]
    %v1250 = vld [vmem:[#allocation8 + $0xf0] sm:$0xff]
    %v1251 = vld [vmem:[#allocation8 + $0xf8] sm:$0xff]
    %v1252 = vld [vmem:[#allocation8 + $0x100] sm:$0xff]
    %v1253 = vld [vmem:[#allocation8 + $0x108] sm:$0xff]
    %v1254 = vld [vmem:[#allocation8 + $0x110] sm:$0xff]
    %v1255 = vld [vmem:[#allocation8 + $0x118] sm:$0xff]
    %v1256 = vld [vmem:[#allocation8 + $0x120] sm:$0xff]
    %v1257 = vld [vmem:[#allocation8 + $0x128] sm:$0xff]
    %v1258 = vld [vmem:[#allocation8 + $0x130] sm:$0xff]
    %v1259 = vld [vmem:[#allocation8 + $0x138] sm:$0xff]
    %v1260 = vld [vmem:[#allocation8 + $0x140] sm:$0xff]
    %v1261 = vld [vmem:[#allocation8 + $0x148] sm:$0xff]
    %v1262 = vld [vmem:[#allocation8 + $0x150] sm:$0xff]
    %v1263 = vld [vmem:[#allocation8 + $0x158] sm:$0xff]
    %v1264 = vld [vmem:[#allocation8 + $0x160] sm:$0xff]
    %v1265 = vld [vmem:[#allocation8 + $0x168] sm:$0xff]
    %v1266 = vld [vmem:[#allocation8 + $0x170] sm:$0xff]
    %v1267 = vld [vmem:[#allocation8 + $0x178] sm:$0xff]
    %v1268 = vld [vmem:[#allocation8 + $0x180] sm:$0xff]
    %v1269 = vld [vmem:[#allocation8 + $0x188] sm:$0xff]
    %v1270 = vld [vmem:[#allocation8 + $0x190] sm:$0xff]
    %v1271 = vld [vmem:[#allocation8 + $0x198] sm:$0xff]
    %v1272 = vld [vmem:[#allocation8 + $0x1a0] sm:$0xff]
    %v1273 = vld [vmem:[#allocation8 + $0x1a8] sm:$0xff]
    %v1274 = vld [vmem:[#allocation8 + $0x1b0] sm:$0xff]
    %v1275 = vld [vmem:[#allocation8 + $0x1b8] sm:$0xff]
    %v1276 = vld [vmem:[#allocation8 + $0x1c0] sm:$0xff]
    %v1277 = vld [vmem:[#allocation8 + $0x1c8] sm:$0xff]
    %v1278 = vld [vmem:[#allocation8 + $0x1d0] sm:$0xff]
    %v1279 = vld [vmem:[#allocation8 + $0x1d8] sm:$0xff]
    %v1280 = vld [vmem:[#allocation8 + $0x1e0] sm:$0xff]
    %v1281 = vld [vmem:[#allocation8 + $0x1e8] sm:$0xff]
    %v1282 = vld [vmem:[#allocation8 + $0x1f0] sm:$0xff]
    %v1283 = vld [vmem:[#allocation8 + $0x1f8] sm:$0xff]
    %v1284 = vld [vmem:[#allocation8 + $0x200] sm:$0xff]
    %v1285 = vld [vmem:[#allocation8 + $0x208] sm:$0xff]
    %v1286 = vld [vmem:[#allocation8 + $0x210] sm:$0xff]
    %v1287 = vld [vmem:[#allocation8 + $0x218] sm:$0xff]
    %v1288 = vld [vmem:[#allocation8 + $0x220] sm:$0xff]
    %v1289 = vld [vmem:[#allocation8 + $0x228] sm:$0xff]
    %v1290 = vld [vmem:[#allocation8 + $0x230] sm:$0xff]
    %v1291 = vld [vmem:[#allocation8 + $0x238] sm:$0xff]
    %v1292 = vld [vmem:[#allocation8 + $0x240] sm:$0xff]
    %v1293 = vld [vmem:[#allocation8 + $0x248] sm:$0xff]
    %v1294 = vld [vmem:[#allocation8 + $0x250] sm:$0xff]
    %v1295 = vld [vmem:[#allocation8 + $0x258] sm:$0xff]
    %v1296 = vld [vmem:[#allocation8 + $0x260] sm:$0xff]
    %v1297 = vld [vmem:[#allocation8 + $0x268] sm:$0xff]
    %v1298 = vld [vmem:[#allocation8 + $0x270] sm:$0xff]
    %v1299 = vld [vmem:[#allocation8 + $0x278] sm:$0xff]
    %v1300 = vld [vmem:[#allocation8 + $0x280] sm:$0xff]
    %v1301 = vld [vmem:[#allocation8 + $0x288] sm:$0xff]
    %v1302 = vld [vmem:[#allocation8 + $0x290] sm:$0xff]
    %v1303 = vld [vmem:[#allocation8 + $0x298] sm:$0xff]
    %v1304 = vld [vmem:[#allocation8 + $0x2a0] sm:$0xff]
    %v1305 = vld [vmem:[#allocation8 + $0x2a8] sm:$0xff]
    %v1306 = vld [vmem:[#allocation8 + $0x2b0] sm:$0xff]
    %v1307 = vld [vmem:[#allocation8 + $0x2b8] sm:$0xff]
    %v1308 = vld [vmem:[#allocation8 + $0x2c0] sm:$0xff]
    %v1309 = vld [vmem:[#allocation8 + $0x2c8] sm:$0xff]
    %v1310 = vld [vmem:[#allocation8 + $0x2d0] sm:$0xff]
    %v1311 = vld [vmem:[#allocation8 + $0x2d8] sm:$0xff]
    %v1312 = vld [vmem:[#allocation8 + $0x2e0] sm:$0xff]
    %v1313 = vld [vmem:[#allocation8 + $0x2e8] sm:$0xff]
    %v1314 = vld [vmem:[#allocation8 + $0x2f0] sm:$0xff]
    %v1315 = vld [vmem:[#allocation8 + $0x2f8] sm:$0xff]
    %v1316 = vld [vmem:[#allocation8 + $0x300] sm:$0xff]
    %v1317 = vld [vmem:[#allocation8 + $0x308] sm:$0xff]
    %v1318 = vld [vmem:[#allocation8 + $0x310] sm:$0xff]
    %v1319 = vld [vmem:[#allocation8 + $0x318] sm:$0xff]
    %v1320 = vld [vmem:[#allocation8 + $0x320] sm:$0xff]
    %v1321 = vld [vmem:[#allocation8 + $0x328] sm:$0xff]
    %v1322 = vld [vmem:[#allocation8 + $0x330] sm:$0xff]
    %v1323 = vld [vmem:[#allocation8 + $0x338] sm:$0xff]
    %v1324 = vld [vmem:[#allocation8 + $0x340] sm:$0xff]
    %v1325 = vld [vmem:[#allocation8 + $0x348] sm:$0xff]
    %v1326 = vld [vmem:[#allocation8 + $0x350] sm:$0xff]
    %v1327 = vld [vmem:[#allocation8 + $0x358] sm:$0xff]
    %v1328 = vld [vmem:[#allocation8 + $0x360] sm:$0xff]
    %v1329 = vld [vmem:[#allocation8 + $0x368] sm:$0xff]
    %v1330 = vld [vmem:[#allocation8 + $0x370] sm:$0xff]
    %v1331 = vld [vmem:[#allocation8 + $0x378] sm:$0xff]
    %v1332 = vld [vmem:[#allocation8 + $0x380] sm:$0xff]
    %v1333 = vld [vmem:[#allocation8 + $0x388] sm:$0xff]
    %v1334 = vld [vmem:[#allocation8 + $0x390] sm:$0xff]
    %v1335 = vld [vmem:[#allocation8 + $0x398] sm:$0xff]
    %v1336 = vld [vmem:[#allocation8 + $0x3a0] sm:$0xff]
    %v1337 = vld [vmem:[#allocation8 + $0x3a8] sm:$0xff]
    %v1338 = vld [vmem:[#allocation8 + $0x3b0] sm:$0xff]
    %v1339 = vld [vmem:[#allocation8 + $0x3b8] sm:$0xff]
    %v1340 = vld [vmem:[#allocation8 + $0x3c0] sm:$0xff]
    %v1341 = vld [vmem:[#allocation8 + $0x3c8] sm:$0xff]
    %v1342 = vld [vmem:[#allocation8 + $0x3d0] sm:$0xff]
    %v1343 = vld [vmem:[#allocation8 + $0x3d8] sm:$0xff]
    %v1344 = vld [vmem:[#allocation8 + $0x3e0] sm:$0xff]
    %v1345 = vld [vmem:[#allocation8 + $0x3e8] sm:$0xff]
    %v1346 = vld [vmem:[#allocation8 + $0x3f0] sm:$0xff]
    %v1347 = vld [vmem:[#allocation8 + $0x3f8] sm:$0xff]
    %v1348 = vld [vmem:[%s4] sm:$0x3]
    %v1350 = vlaneseq
    %v1351 = vshrl.u32 %v1350, 7
    %v1352 = vsub.s32 0, %v1351
    %v1353 = vrot.slane %v1348, %v1352
    %v1354 = vlaneseq
    %v1355 = vshrl.u32 %v1354, 7
    %v1356 = vsub.s32 1, %v1355
    %v1357 = vrot.slane %v1348, %v1356
    %v1488 = vunpack.c.l.b16 %v1220
    %v1489 = vunpack.c.h.b16 %v1220
    %v1490 = vunpack.c.l.b16 %v1221
    %v1491 = vunpack.c.h.b16 %v1221
    %v1492 = vunpack.c.l.b16 %v1222
    %v1493 = vunpack.c.h.b16 %v1222
    %v1494 = vunpack.c.l.b16 %v1223
    %v1495 = vunpack.c.h.b16 %v1223
    %v1496 = vunpack.c.l.b16 %v1224
    %v1497 = vunpack.c.h.b16 %v1224
    %v1498 = vunpack.c.l.b16 %v1225
    %v1499 = vunpack.c.h.b16 %v1225
    %v1500 = vunpack.c.l.b16 %v1226
    %v1501 = vunpack.c.h.b16 %v1226
    %v1502 = vunpack.c.l.b16 %v1227
    %v1503 = vunpack.c.h.b16 %v1227
    %v1504 = vunpack.c.l.b16 %v1228
    %v1505 = vunpack.c.h.b16 %v1228
    %v1506 = vunpack.c.l.b16 %v1229
    %v1507 = vunpack.c.h.b16 %v1229
    %v1508 = vunpack.c.l.b16 %v1230
    %v1509 = vunpack.c.h.b16 %v1230
    %v1510 = vunpack.c.l.b16 %v1231
    %v1511 = vunpack.c.h.b16 %v1231
    %v1512 = vunpack.c.l.b16 %v1232
    %v1513 = vunpack.c.h.b16 %v1232
    %v1514 = vunpack.c.l.b16 %v1233
    %v1515 = vunpack.c.h.b16 %v1233
    %v1516 = vunpack.c.l.b16 %v1234
    %v1517 = vunpack.c.h.b16 %v1234
    %v1518 = vunpack.c.l.b16 %v1235
    %v1519 = vunpack.c.h.b16 %v1235
    %v1520 = vunpack.c.l.b16 %v1236
    %v1521 = vunpack.c.h.b16 %v1236
    %v1522 = vunpack.c.l.b16 %v1237
    %v1523 = vunpack.c.h.b16 %v1237
    %v1524 = vunpack.c.l.b16 %v1238
    %v1525 = vunpack.c.h.b16 %v1238
    %v1526 = vunpack.c.l.b16 %v1239
    %v1527 = vunpack.c.h.b16 %v1239
    %v1528 = vunpack.c.l.b16 %v1240
    %v1529 = vunpack.c.h.b16 %v1240
    %v1530 = vunpack.c.l.b16 %v1241
    %v1531 = vunpack.c.h.b16 %v1241
    %v1532 = vunpack.c.l.b16 %v1242
    %v1533 = vunpack.c.h.b16 %v1242
    %v1534 = vunpack.c.l.b16 %v1243
    %v1535 = vunpack.c.h.b16 %v1243
    %v1536 = vunpack.c.l.b16 %v1244
    %v1537 = vunpack.c.h.b16 %v1244
    %v1538 = vunpack.c.l.b16 %v1245
    %v1539 = vunpack.c.h.b16 %v1245
    %v1540 = vunpack.c.l.b16 %v1246
    %v1541 = vunpack.c.h.b16 %v1246
    %v1542 = vunpack.c.l.b16 %v1247
    %v1543 = vunpack.c.h.b16 %v1247
    %v1544 = vunpack.c.l.b16 %v1248
    %v1545 = vunpack.c.h.b16 %v1248
    %v1546 = vunpack.c.l.b16 %v1249
    %v1547 = vunpack.c.h.b16 %v1249
    %v1548 = vunpack.c.l.b16 %v1250
    %v1549 = vunpack.c.h.b16 %v1250
    %v1550 = vunpack.c.l.b16 %v1251
    %v1551 = vunpack.c.h.b16 %v1251
    %v1552 = vunpack.c.l.b16 %v1252
    %v1553 = vunpack.c.h.b16 %v1252
    %v1554 = vunpack.c.l.b16 %v1253
    %v1555 = vunpack.c.h.b16 %v1253
    %v1556 = vunpack.c.l.b16 %v1254
    %v1557 = vunpack.c.h.b16 %v1254
    %v1558 = vunpack.c.l.b16 %v1255
    %v1559 = vunpack.c.h.b16 %v1255
    %v1560 = vunpack.c.l.b16 %v1256
    %v1561 = vunpack.c.h.b16 %v1256
    %v1562 = vunpack.c.l.b16 %v1257
    %v1563 = vunpack.c.h.b16 %v1257
    %v1564 = vunpack.c.l.b16 %v1258
    %v1565 = vunpack.c.h.b16 %v1258
    %v1566 = vunpack.c.l.b16 %v1259
    %v1567 = vunpack.c.h.b16 %v1259
    %v1568 = vunpack.c.l.b16 %v1260
    %v1569 = vunpack.c.h.b16 %v1260
    %v1570 = vunpack.c.l.b16 %v1261
    %v1571 = vunpack.c.h.b16 %v1261
    %v1572 = vunpack.c.l.b16 %v1262
    %v1573 = vunpack.c.h.b16 %v1262
    %v1574 = vunpack.c.l.b16 %v1263
    %v1575 = vunpack.c.h.b16 %v1263
    %v1576 = vunpack.c.l.b16 %v1264
    %v1577 = vunpack.c.h.b16 %v1264
    %v1578 = vunpack.c.l.b16 %v1265
    %v1579 = vunpack.c.h.b16 %v1265
    %v1580 = vunpack.c.l.b16 %v1266
    %v1581 = vunpack.c.h.b16 %v1266
    %v1582 = vunpack.c.l.b16 %v1267
    %v1583 = vunpack.c.h.b16 %v1267
    %v1584 = vunpack.c.l.b16 %v1268
    %v1585 = vunpack.c.h.b16 %v1268
    %v1586 = vunpack.c.l.b16 %v1269
    %v1587 = vunpack.c.h.b16 %v1269
    %v1588 = vunpack.c.l.b16 %v1270
    %v1589 = vunpack.c.h.b16 %v1270
    %v1590 = vunpack.c.l.b16 %v1271
    %v1591 = vunpack.c.h.b16 %v1271
    %v1592 = vunpack.c.l.b16 %v1272
    %v1593 = vunpack.c.h.b16 %v1272
    %v1594 = vunpack.c.l.b16 %v1273
    %v1595 = vunpack.c.h.b16 %v1273
    %v1596 = vunpack.c.l.b16 %v1274
    %v1597 = vunpack.c.h.b16 %v1274
    %v1598 = vunpack.c.l.b16 %v1275
    %v1599 = vunpack.c.h.b16 %v1275
    %v1600 = vunpack.c.l.b16 %v1276
    %v1601 = vunpack.c.h.b16 %v1276
    %v1602 = vunpack.c.l.b16 %v1277
    %v1603 = vunpack.c.h.b16 %v1277
    %v1604 = vunpack.c.l.b16 %v1278
    %v1605 = vunpack.c.h.b16 %v1278
    %v1606 = vunpack.c.l.b16 %v1279
    %v1607 = vunpack.c.h.b16 %v1279
    %v1608 = vunpack.c.l.b16 %v1280
    %v1609 = vunpack.c.h.b16 %v1280
    %v1610 = vunpack.c.l.b16 %v1281
    %v1611 = vunpack.c.h.b16 %v1281
    %v1612 = vunpack.c.l.b16 %v1282
    %v1613 = vunpack.c.h.b16 %v1282
    %v1614 = vunpack.c.l.b16 %v1283
    %v1615 = vunpack.c.h.b16 %v1283
    %v1616 = vunpack.c.l.b16 %v1284
    %v1617 = vunpack.c.h.b16 %v1284
    %v1618 = vunpack.c.l.b16 %v1285
    %v1619 = vunpack.c.h.b16 %v1285
    %v1620 = vunpack.c.l.b16 %v1286
    %v1621 = vunpack.c.h.b16 %v1286
    %v1622 = vunpack.c.l.b16 %v1287
    %v1623 = vunpack.c.h.b16 %v1287
    %v1624 = vunpack.c.l.b16 %v1288
    %v1625 = vunpack.c.h.b16 %v1288
    %v1626 = vunpack.c.l.b16 %v1289
    %v1627 = vunpack.c.h.b16 %v1289
    %v1628 = vunpack.c.l.b16 %v1290
    %v1629 = vunpack.c.h.b16 %v1290
    %v1630 = vunpack.c.l.b16 %v1291
    %v1631 = vunpack.c.h.b16 %v1291
    %v1632 = vunpack.c.l.b16 %v1292
    %v1633 = vunpack.c.h.b16 %v1292
    %v1634 = vunpack.c.l.b16 %v1293
    %v1635 = vunpack.c.h.b16 %v1293
    %v1636 = vunpack.c.l.b16 %v1294
    %v1637 = vunpack.c.h.b16 %v1294
    %v1638 = vunpack.c.l.b16 %v1295
    %v1639 = vunpack.c.h.b16 %v1295
    %v1640 = vunpack.c.l.b16 %v1296
    %v1641 = vunpack.c.h.b16 %v1296
    %v1642 = vunpack.c.l.b16 %v1297
    %v1643 = vunpack.c.h.b16 %v1297
    %v1644 = vunpack.c.l.b16 %v1298
    %v1645 = vunpack.c.h.b16 %v1298
    %v1646 = vunpack.c.l.b16 %v1299
    %v1647 = vunpack.c.h.b16 %v1299
    %v1648 = vunpack.c.l.b16 %v1300
    %v1649 = vunpack.c.h.b16 %v1300
    %v1650 = vunpack.c.l.b16 %v1301
    %v1651 = vunpack.c.h.b16 %v1301
    %v1652 = vunpack.c.l.b16 %v1302
    %v1653 = vunpack.c.h.b16 %v1302
    %v1654 = vunpack.c.l.b16 %v1303
    %v1655 = vunpack.c.h.b16 %v1303
    %v1656 = vunpack.c.l.b16 %v1304
    %v1657 = vunpack.c.h.b16 %v1304
    %v1658 = vunpack.c.l.b16 %v1305
    %v1659 = vunpack.c.h.b16 %v1305
    %v1660 = vunpack.c.l.b16 %v1306
    %v1661 = vunpack.c.h.b16 %v1306
    %v1662 = vunpack.c.l.b16 %v1307
    %v1663 = vunpack.c.h.b16 %v1307
    %v1664 = vunpack.c.l.b16 %v1308
    %v1665 = vunpack.c.h.b16 %v1308
    %v1666 = vunpack.c.l.b16 %v1309
    %v1667 = vunpack.c.h.b16 %v1309
    %v1668 = vunpack.c.l.b16 %v1310
    %v1669 = vunpack.c.h.b16 %v1310
    %v1670 = vunpack.c.l.b16 %v1311
    %v1671 = vunpack.c.h.b16 %v1311
    %v1672 = vunpack.c.l.b16 %v1312
    %v1673 = vunpack.c.h.b16 %v1312
    %v1674 = vunpack.c.l.b16 %v1313
    %v1675 = vunpack.c.h.b16 %v1313
    %v1676 = vunpack.c.l.b16 %v1314
    %v1677 = vunpack.c.h.b16 %v1314
    %v1678 = vunpack.c.l.b16 %v1315
    %v1679 = vunpack.c.h.b16 %v1315
    %v1680 = vunpack.c.l.b16 %v1316
    %v1681 = vunpack.c.h.b16 %v1316
    %v1682 = vunpack.c.l.b16 %v1317
    %v1683 = vunpack.c.h.b16 %v1317
    %v1684 = vunpack.c.l.b16 %v1318
    %v1685 = vunpack.c.h.b16 %v1318
    %v1686 = vunpack.c.l.b16 %v1319
    %v1687 = vunpack.c.h.b16 %v1319
    %v1688 = vunpack.c.l.b16 %v1320
    %v1689 = vunpack.c.h.b16 %v1320
    %v1690 = vunpack.c.l.b16 %v1321
    %v1691 = vunpack.c.h.b16 %v1321
    %v1692 = vunpack.c.l.b16 %v1322
    %v1693 = vunpack.c.h.b16 %v1322
    %v1694 = vunpack.c.l.b16 %v1323
    %v1695 = vunpack.c.h.b16 %v1323
    %v1696 = vunpack.c.l.b16 %v1324
    %v1697 = vunpack.c.h.b16 %v1324
    %v1698 = vunpack.c.l.b16 %v1325
    %v1699 = vunpack.c.h.b16 %v1325
    %v1700 = vunpack.c.l.b16 %v1326
    %v1701 = vunpack.c.h.b16 %v1326
    %v1702 = vunpack.c.l.b16 %v1327
    %v1703 = vunpack.c.h.b16 %v1327
    %v1704 = vunpack.c.l.b16 %v1328
    %v1705 = vunpack.c.h.b16 %v1328
    %v1706 = vunpack.c.l.b16 %v1329
    %v1707 = vunpack.c.h.b16 %v1329
    %v1708 = vunpack.c.l.b16 %v1330
    %v1709 = vunpack.c.h.b16 %v1330
    %v1710 = vunpack.c.l.b16 %v1331
    %v1711 = vunpack.c.h.b16 %v1331
    %v1712 = vunpack.c.l.b16 %v1332
    %v1713 = vunpack.c.h.b16 %v1332
    %v1714 = vunpack.c.l.b16 %v1333
    %v1715 = vunpack.c.h.b16 %v1333
    %v1716 = vunpack.c.l.b16 %v1334
    %v1717 = vunpack.c.h.b16 %v1334
    %v1718 = vunpack.c.l.b16 %v1335
    %v1719 = vunpack.c.h.b16 %v1335
    %v1720 = vunpack.c.l.b16 %v1336
    %v1721 = vunpack.c.h.b16 %v1336
    %v1722 = vunpack.c.l.b16 %v1337
    %v1723 = vunpack.c.h.b16 %v1337
    %v1724 = vunpack.c.l.b16 %v1338
    %v1725 = vunpack.c.h.b16 %v1338
    %v1726 = vunpack.c.l.b16 %v1339
    %v1727 = vunpack.c.h.b16 %v1339
    %v1728 = vunpack.c.l.b16 %v1340
    %v1729 = vunpack.c.h.b16 %v1340
    %v1730 = vunpack.c.l.b16 %v1341
    %v1731 = vunpack.c.h.b16 %v1341
    %v1732 = vunpack.c.l.b16 %v1342
    %v1733 = vunpack.c.h.b16 %v1342
    %v1734 = vunpack.c.l.b16 %v1343
    %v1735 = vunpack.c.h.b16 %v1343
    %v1736 = vunpack.c.l.b16 %v1344
    %v1737 = vunpack.c.h.b16 %v1344
    %v1738 = vunpack.c.l.b16 %v1345
    %v1739 = vunpack.c.h.b16 %v1345
    %v1740 = vunpack.c.l.b16 %v1346
    %v1741 = vunpack.c.h.b16 %v1346
    %v1742 = vunpack.c.l.b16 %v1347
    %v1743 = vunpack.c.h.b16 %v1347
    %v1744 = vpack.c.b16 %v1490, %v1488
    %v1745 = vpack.c.b16 %v1491, %v1489
    %v1746 = vpack.c.b16 %v1494, %v1492
    %v1747 = vpack.c.b16 %v1495, %v1493
    %v1748 = vpack.c.b16 %v1498, %v1496
    %v1749 = vpack.c.b16 %v1499, %v1497
    %v1750 = vpack.c.b16 %v1502, %v1500
    %v1751 = vpack.c.b16 %v1503, %v1501
    %v1752 = vpack.c.b16 %v1506, %v1504
    %v1753 = vpack.c.b16 %v1507, %v1505
    %v1754 = vpack.c.b16 %v1510, %v1508
    %v1755 = vpack.c.b16 %v1511, %v1509
    %v1756 = vpack.c.b16 %v1514, %v1512
    %v1757 = vpack.c.b16 %v1515, %v1513
    %v1758 = vpack.c.b16 %v1518, %v1516
    %v1759 = vpack.c.b16 %v1519, %v1517
    %v1760 = vpack.c.b16 %v1522, %v1520
    %v1761 = vpack.c.b16 %v1523, %v1521
    %v1762 = vpack.c.b16 %v1526, %v1524
    %v1763 = vpack.c.b16 %v1527, %v1525
    %v1764 = vpack.c.b16 %v1530, %v1528
    %v1765 = vpack.c.b16 %v1531, %v1529
    %v1766 = vpack.c.b16 %v1534, %v1532
    %v1767 = vpack.c.b16 %v1535, %v1533
    %v1768 = vpack.c.b16 %v1538, %v1536
    %v1769 = vpack.c.b16 %v1539, %v1537
    %v1770 = vpack.c.b16 %v1542, %v1540
    %v1771 = vpack.c.b16 %v1543, %v1541
    %v1772 = vpack.c.b16 %v1546, %v1544
    %v1773 = vpack.c.b16 %v1547, %v1545
    %v1774 = vpack.c.b16 %v1550, %v1548
    %v1775 = vpack.c.b16 %v1551, %v1549
    %v1776 = vpack.c.b16 %v1554, %v1552
    %v1777 = vpack.c.b16 %v1555, %v1553
    %v1778 = vpack.c.b16 %v1558, %v1556
    %v1779 = vpack.c.b16 %v1559, %v1557
    %v1780 = vpack.c.b16 %v1562, %v1560
    %v1781 = vpack.c.b16 %v1563, %v1561
    %v1782 = vpack.c.b16 %v1566, %v1564
    %v1783 = vpack.c.b16 %v1567, %v1565
    %v1784 = vpack.c.b16 %v1570, %v1568
    %v1785 = vpack.c.b16 %v1571, %v1569
    %v1786 = vpack.c.b16 %v1574, %v1572
    %v1787 = vpack.c.b16 %v1575, %v1573
    %v1788 = vpack.c.b16 %v1578, %v1576
    %v1789 = vpack.c.b16 %v1579, %v1577
    %v1790 = vpack.c.b16 %v1582, %v1580
    %v1791 = vpack.c.b16 %v1583, %v1581
    %v1792 = vpack.c.b16 %v1586, %v1584
    %v1793 = vpack.c.b16 %v1587, %v1585
    %v1794 = vpack.c.b16 %v1590, %v1588
    %v1795 = vpack.c.b16 %v1591, %v1589
    %v1796 = vpack.c.b16 %v1594, %v1592
    %v1797 = vpack.c.b16 %v1595, %v1593
    %v1798 = vpack.c.b16 %v1598, %v1596
    %v1799 = vpack.c.b16 %v1599, %v1597
    %v1800 = vpack.c.b16 %v1602, %v1600
    %v1801 = vpack.c.b16 %v1603, %v1601
    %v1802 = vpack.c.b16 %v1606, %v1604
    %v1803 = vpack.c.b16 %v1607, %v1605
    %v1804 = vpack.c.b16 %v1610, %v1608
    %v1805 = vpack.c.b16 %v1611, %v1609
    %v1806 = vpack.c.b16 %v1614, %v1612
    %v1807 = vpack.c.b16 %v1615, %v1613
    %v1808 = vpack.c.b16 %v1618, %v1616
    %v1809 = vpack.c.b16 %v1619, %v1617
    %v1810 = vpack.c.b16 %v1622, %v1620
    %v1811 = vpack.c.b16 %v1623, %v1621
    %v1812 = vpack.c.b16 %v1626, %v1624
    %v1813 = vpack.c.b16 %v1627, %v1625
    %v1814 = vpack.c.b16 %v1630, %v1628
    %v1815 = vpack.c.b16 %v1631, %v1629
    %v1816 = vpack.c.b16 %v1634, %v1632
    %v1817 = vpack.c.b16 %v1635, %v1633
    %v1818 = vpack.c.b16 %v1638, %v1636
    %v1819 = vpack.c.b16 %v1639, %v1637
    %v1820 = vpack.c.b16 %v1642, %v1640
    %v1821 = vpack.c.b16 %v1643, %v1641
    %v1822 = vpack.c.b16 %v1646, %v1644
    %v1823 = vpack.c.b16 %v1647, %v1645
    %v1824 = vpack.c.b16 %v1650, %v1648
    %v1825 = vpack.c.b16 %v1651, %v1649
    %v1826 = vpack.c.b16 %v1654, %v1652
    %v1827 = vpack.c.b16 %v1655, %v1653
    %v1828 = vpack.c.b16 %v1658, %v1656
    %v1829 = vpack.c.b16 %v1659, %v1657
    %v1830 = vpack.c.b16 %v1662, %v1660
    %v1831 = vpack.c.b16 %v1663, %v1661
    %v1832 = vpack.c.b16 %v1666, %v1664
    %v1833 = vpack.c.b16 %v1667, %v1665
    %v1834 = vpack.c.b16 %v1670, %v1668
    %v1835 = vpack.c.b16 %v1671, %v1669
    %v1836 = vpack.c.b16 %v1674, %v1672
    %v1837 = vpack.c.b16 %v1675, %v1673
    %v1838 = vpack.c.b16 %v1678, %v1676
    %v1839 = vpack.c.b16 %v1679, %v1677
    %v1840 = vpack.c.b16 %v1682, %v1680
    %v1841 = vpack.c.b16 %v1683, %v1681
    %v1842 = vpack.c.b16 %v1686, %v1684
    %v1843 = vpack.c.b16 %v1687, %v1685
    %v1844 = vpack.c.b16 %v1690, %v1688
    %v1845 = vpack.c.b16 %v1691, %v1689
    %v1846 = vpack.c.b16 %v1694, %v1692
    %v1847 = vpack.c.b16 %v1695, %v1693
    %v1848 = vpack.c.b16 %v1698, %v1696
    %v1849 = vpack.c.b16 %v1699, %v1697
    %v1850 = vpack.c.b16 %v1702, %v1700
    %v1851 = vpack.c.b16 %v1703, %v1701
    %v1852 = vpack.c.b16 %v1706, %v1704
    %v1853 = vpack.c.b16 %v1707, %v1705
    %v1854 = vpack.c.b16 %v1710, %v1708
    %v1855 = vpack.c.b16 %v1711, %v1709
    %v1856 = vpack.c.b16 %v1714, %v1712
    %v1857 = vpack.c.b16 %v1715, %v1713
    %v1858 = vpack.c.b16 %v1718, %v1716
    %v1859 = vpack.c.b16 %v1719, %v1717
    %v1860 = vpack.c.b16 %v1722, %v1720
    %v1861 = vpack.c.b16 %v1723, %v1721
    %v1862 = vpack.c.b16 %v1726, %v1724
    %v1863 = vpack.c.b16 %v1727, %v1725
    %v1864 = vpack.c.b16 %v1730, %v1728
    %v1865 = vpack.c.b16 %v1731, %v1729
    %v1866 = vpack.c.b16 %v1734, %v1732
    %v1867 = vpack.c.b16 %v1735, %v1733
    %v1868 = vpack.c.b16 %v1738, %v1736
    %v1869 = vpack.c.b16 %v1739, %v1737
    %v1870 = vpack.c.b16 %v1742, %v1740
    %v1871 = vpack.c.b16 %v1743, %v1741
    %2000 = vmatprep.subr.bf16.mxu0 %v1759
    %2001 = vmatpush1.bf16.msra.mxu0 %v1758
    %2002 = vmatprep.subr.bf16.mxu0 %v1757
    %2003 = vmatpush1.bf16.msra.mxu0 %v1756
    %2004 = vmatprep.subr.bf16.mxu0 %v1755
    %2005 = vmatpush1.bf16.msra.mxu0 %v1754
    %2006 = vmatprep.subr.bf16.mxu0 %v1753
    %2007 = vmatpush1.bf16.msra.mxu0 %v1752
    %2008 = vmatprep.subr.bf16.mxu0 %v1751
    %2009 = vmatpush1.bf16.msra.mxu0 %v1750
    %2010 = vmatprep.subr.bf16.mxu0 %v1749
    %2011 = vmatpush1.bf16.msra.mxu0 %v1748
    %2012 = vmatprep.subr.bf16.mxu0 %v1747
    %2013 = vmatpush1.bf16.msra.mxu0 %v1746
    %2014 = vmatprep.subr.bf16.mxu0 %v1745
    %2015 = vmatpush1.bf16.msra.mxu0 %v1744
    %2016 = vmatprep.subr.bf16.mxu0 %v1775
    %2017 = vmatpush2.bf16.msra.mxu0 %v1774
    %2018 = vmatprep.subr.bf16.mxu0 %v1773
    %2019 = vmatpush2.bf16.msra.mxu0 %v1772
    %2020 = vmatprep.subr.bf16.mxu0 %v1771
    %2021 = vmatpush2.bf16.msra.mxu0 %v1770
    %2022 = vmatprep.subr.bf16.mxu0 %v1769
    %2023 = vmatpush2.bf16.msra.mxu0 %v1768
    %2024 = vmatprep.subr.bf16.mxu0 %v1767
    %2025 = vmatpush2.bf16.msra.mxu0 %v1766
    %2026 = vmatprep.subr.bf16.mxu0 %v1765
    %2027 = vmatpush2.bf16.msra.mxu0 %v1764
    %2028 = vmatprep.subr.bf16.mxu0 %v1763
    %2029 = vmatpush2.bf16.msra.mxu0 %v1762
    %2030 = vmatprep.subr.bf16.mxu0 %v1761
    %2031 = vmatpush2.bf16.msra.mxu0 %v1760
    %2032 = vmatprep.mubr.bf16.mxu0 %v1213
    %2033 = vmatmul.mubr.bf16.gmra.mxu0 %v1212
    %v2034 = vpop.f32.mrf.mxu0
    %v2035 = vadd.f32 %v1353, %v2034
    %v2036 = vpop.f32.mrf.mxu0
    %v2037 = vadd.f32 %v1357, %v2036
    %v2038 = vpop.f32.mrf.mxu0
    %v2039 = vadd.f32 %v1353, %v2038
    %v2040 = vpop.f32.mrf.mxu0
    %v2041 = vadd.f32 %v1357, %v2040
    %2042 = vdwg.mxu0
    %2043 = vmatprep.subr.bf16.mxu0 %v1791
    %2044 = vmatpush1.bf16.msra.mxu0 %v1790
    %2045 = vmatprep.subr.bf16.mxu0 %v1789
    %2046 = vmatpush1.bf16.msra.mxu0 %v1788
    %2047 = vmatprep.subr.bf16.mxu0 %v1787
    %2048 = vmatpush1.bf16.msra.mxu0 %v1786
    %2049 = vmatprep.subr.bf16.mxu0 %v1785
    %2050 = vmatpush1.bf16.msra.mxu0 %v1784
    %2051 = vmatprep.subr.bf16.mxu0 %v1783
    %2052 = vmatpush1.bf16.msra.mxu0 %v1782
    %2053 = vmatprep.subr.bf16.mxu0 %v1781
    %2054 = vmatpush1.bf16.msra.mxu0 %v1780
    %2055 = vmatprep.subr.bf16.mxu0 %v1779
    %2056 = vmatpush1.bf16.msra.mxu0 %v1778
    %2057 = vmatprep.subr.bf16.mxu0 %v1777
    %2058 = vmatpush1.bf16.msra.mxu0 %v1776
    %2059 = vmatprep.subr.bf16.mxu0 %v1807
    %2060 = vmatpush2.bf16.msra.mxu0 %v1806
    %2061 = vmatprep.subr.bf16.mxu0 %v1805
    %2062 = vmatpush2.bf16.msra.mxu0 %v1804
    %2063 = vmatprep.subr.bf16.mxu0 %v1803
    %2064 = vmatpush2.bf16.msra.mxu0 %v1802
    %2065 = vmatprep.subr.bf16.mxu0 %v1801
    %2066 = vmatpush2.bf16.msra.mxu0 %v1800
    %2067 = vmatprep.subr.bf16.mxu0 %v1799
    %2068 = vmatpush2.bf16.msra.mxu0 %v1798
    %2069 = vmatprep.subr.bf16.mxu0 %v1797
    %2070 = vmatpush2.bf16.msra.mxu0 %v1796
    %2071 = vmatprep.subr.bf16.mxu0 %v1795
    %2072 = vmatpush2.bf16.msra.mxu0 %v1794
    %2073 = vmatprep.subr.bf16.mxu0 %v1793
    %2074 = vmatpush2.bf16.msra.mxu0 %v1792
    %2075 = vmatprep.mubr.bf16.mxu0 %v1215
    %2076 = vmatmul.mubr.bf16.gmra.mxu0 %v1214
    %v2077 = vpop.f32.mrf.mxu0
    %v2078 = vadd.f32 %v2035, %v2077
    %v2079 = vpop.f32.mrf.mxu0
    %v2080 = vadd.f32 %v2037, %v2079
    %v2081 = vpop.f32.mrf.mxu0
    %v2082 = vadd.f32 %v2039, %v2081
    %v2083 = vpop.f32.mrf.mxu0
    %v2084 = vadd.f32 %v2041, %v2083
    %2085 = vdwg.mxu0
    %2086 = vmatprep.subr.bf16.mxu0 %v1823
    %2087 = vmatpush1.bf16.msra.mxu0 %v1822
    %2088 = vmatprep.subr.bf16.mxu0 %v1821
    %2089 = vmatpush1.bf16.msra.mxu0 %v1820
    %2090 = vmatprep.subr.bf16.mxu0 %v1819
    %2091 = vmatpush1.bf16.msra.mxu0 %v1818
    %2092 = vmatprep.subr.bf16.mxu0 %v1817
    %2093 = vmatpush1.bf16.msra.mxu0 %v1816
    %2094 = vmatprep.subr.bf16.mxu0 %v1815
    %2095 = vmatpush1.bf16.msra.mxu0 %v1814
    %2096 = vmatprep.subr.bf16.mxu0 %v1813
    %2097 = vmatpush1.bf16.msra.mxu0 %v1812
    %2098 = vmatprep.subr.bf16.mxu0 %v1811
    %2099 = vmatpush1.bf16.msra.mxu0 %v1810
    %2100 = vmatprep.subr.bf16.mxu0 %v1809
    %2101 = vmatpush1.bf16.msra.mxu0 %v1808
    %2102 = vmatprep.subr.bf16.mxu0 %v1839
    %2103 = vmatpush2.bf16.msra.mxu0 %v1838
    %2104 = vmatprep.subr.bf16.mxu0 %v1837
    %2105 = vmatpush2.bf16.msra.mxu0 %v1836
    %2106 = vmatprep.subr.bf16.mxu0 %v1835
    %2107 = vmatpush2.bf16.msra.mxu0 %v1834
    %2108 = vmatprep.subr.bf16.mxu0 %v1833
    %2109 = vmatpush2.bf16.msra.mxu0 %v1832
    %2110 = vmatprep.subr.bf16.mxu0 %v1831
    %2111 = vmatpush2.bf16.msra.mxu0 %v1830
    %2112 = vmatprep.subr.bf16.mxu0 %v1829
    %2113 = vmatpush2.bf16.msra.mxu0 %v1828
    %2114 = vmatprep.subr.bf16.mxu0 %v1827
    %2115 = vmatpush2.bf16.msra.mxu0 %v1826
    %2116 = vmatprep.subr.bf16.mxu0 %v1825
    %2117 = vmatpush2.bf16.msra.mxu0 %v1824
    %2118 = vmatprep.mubr.bf16.mxu0 %v1217
    %2119 = vmatmul.mubr.bf16.gmra.mxu0 %v1216
    %v2120 = vpop.f32.mrf.mxu0
    %v2121 = vadd.f32 %v2078, %v2120
    %v2122 = vpop.f32.mrf.mxu0
    %v2123 = vadd.f32 %v2080, %v2122
    %v2124 = vpop.f32.mrf.mxu0
    %v2125 = vadd.f32 %v2082, %v2124
    %v2126 = vpop.f32.mrf.mxu0
    %v2127 = vadd.f32 %v2084, %v2126
    %2128 = vdwg.mxu0
    %2129 = vmatprep.subr.bf16.mxu0 %v1855
    %2130 = vmatpush1.bf16.msra.mxu0 %v1854
    %2131 = vmatprep.subr.bf16.mxu0 %v1853
    %2132 = vmatpush1.bf16.msra.mxu0 %v1852
    %2133 = vmatprep.subr.bf16.mxu0 %v1851
    %2134 = vmatpush1.bf16.msra.mxu0 %v1850
    %2135 = vmatprep.subr.bf16.mxu0 %v1849
    %2136 = vmatpush1.bf16.msra.mxu0 %v1848
    %2137 = vmatprep.subr.bf16.mxu0 %v1847
    %2138 = vmatpush1.bf16.msra.mxu0 %v1846
    %2139 = vmatprep.subr.bf16.mxu0 %v1845
    %2140 = vmatpush1.bf16.msra.mxu0 %v1844
    %2141 = vmatprep.subr.bf16.mxu0 %v1843
    %2142 = vmatpush1.bf16.msra.mxu0 %v1842
    %2143 = vmatprep.subr.bf16.mxu0 %v1841
    %2144 = vmatpush1.bf16.msra.mxu0 %v1840
    %2145 = vmatprep.subr.bf16.mxu0 %v1871
    %2146 = vmatpush2.bf16.msra.mxu0 %v1870
    %2147 = vmatprep.subr.bf16.mxu0 %v1869
    %2148 = vmatpush2.bf16.msra.mxu0 %v1868
    %2149 = vmatprep.subr.bf16.mxu0 %v1867
    %2150 = vmatpush2.bf16.msra.mxu0 %v1866
    %2151 = vmatprep.subr.bf16.mxu0 %v1865
    %2152 = vmatpush2.bf16.msra.mxu0 %v1864
    %2153 = vmatprep.subr.bf16.mxu0 %v1863
    %2154 = vmatpush2.bf16.msra.mxu0 %v1862
    %2155 = vmatprep.subr.bf16.mxu0 %v1861
    %2156 = vmatpush2.bf16.msra.mxu0 %v1860
    %2157 = vmatprep.subr.bf16.mxu0 %v1859
    %2158 = vmatpush2.bf16.msra.mxu0 %v1858
    %2159 = vmatprep.subr.bf16.mxu0 %v1857
    %2160 = vmatpush2.bf16.msra.mxu0 %v1856
    %2161 = vmatprep.mubr.bf16.mxu0 %v1219
    %2162 = vmatmul.mubr.bf16.gmra.mxu0 %v1218
    %v2163 = vpop.f32.mrf.mxu0
    %v2164 = vadd.f32 %v2121, %v2163
    %v2165 = vpop.f32.mrf.mxu0
    %v2166 = vadd.f32 %v2123, %v2165
    %v2167 = vpop.f32.mrf.mxu0
    %v2168 = vadd.f32 %v2125, %v2167
    %v2169 = vpop.f32.mrf.mxu0
    %v2170 = vadd.f32 %v2127, %v2169
    %2171 = vdwg.mxu0
    %v2172 = vpack.c.bf16 %v2168, %v2164
    %v2173 = vpack.c.bf16 %v2170, %v2166
    %v2176 = vunpack.c.l.b16 %v2172
    %v2177 = vunpack.c.l.b16 %v2173
    %v2178 = vunpack.c.h.b16 %v2172
    %v2179 = vunpack.c.h.b16 %v2173
    %v2180 = vpack.c.b16 %v2177, %v2176
    %v2181 = vpack.c.b16 %v2179, %v2178
    %2184 = vst [vmem:[#allocation10] sm:$0xff] %v2180
    %2185 = vst [vmem:[#allocation10 + $0x8] sm:$0xff] %v2181
    // Predicated region
    $region38: #{tpu_custom_call.1} parent=1 // pred_check
      _
    $region39: #{tpu_custom_call.1} parent=1 // pred_check_branch
      %2187 = sbr.rel (0) target = $region41
    $region40: #{tpu_custom_call.1} parent=1 // pred_region
      %s2189 = ssub.s32 256, 256
      %2190 = vsyncadd [#allocation4], %s2189
      %s2191 = sshll.u32 [#allocation10], 4
      %s2192 = int_to_ptr.vmem [resolvable:$true] %s2191
      %2197 = dma.vmem_to_hbm [thread:$0]  %s2192, 256, %s5, [#allocation4], 128, 128, 8
    $region41: #{tpu_custom_call.1} parent=1 // pred_fallthru
      _
    // Predicated region
    $region42: #{tpu_custom_call.1} parent=1 // pred_check
      _
    $region43: #{tpu_custom_call.1} parent=1 // pred_check_branch
      %2199 = sbr.rel (0) target = $region45
    $region44: #{tpu_custom_call.1} parent=1 // pred_region
      %2200 = dma.done [#allocation4], 256
    $region45: #{tpu_custom_call.1} parent=1 // pred_fallthru
      _
    %2201 = vsyncpa [#allocation3], 1
    %2202 = vsyncpa [#allocation6], 1
    %2203 = vsyncpa [#allocation9], 1
    %2204 = vsyncpa [#allocation4], 1

</llo_original>
